<compile_context>
chip_gen: v7x
topology: tpu7x:2x2x1
jax: 0.10.0
libtpu: 0.0.40
codegen_flags: <defaults>
</compile_context>

<pallas_src>
import numpy as np
import jax
import jax.numpy as jnp
from jax.experimental import pallas as pl
from jax.experimental.pallas import tpu as pltpu


def _round_up(a, m):
    return (a + m - 1) // m * m


def _cdiv(a, m):
    return (a + m - 1) // m


# ----------------------------------------------------------------------------
# Pallas kernel: one (rows, tk) x (tk, c_pad) bf16 matmul per grid step,
# accumulated directly into the VMEM-resident f32 output block (P3 pattern).
# ----------------------------------------------------------------------------
def _roi_align_kernel(starts_ref, m_ref, data_ref, out_ref):
    del starts_ref  # consumed by the index_maps only

    @pl.when(pl.program_id(1) == 0)
    def _():
        out_ref[...] = jnp.zeros_like(out_ref)

    out_ref[...] += jnp.dot(m_ref[...], data_ref[...],
                            preferred_element_type=jnp.float32)


# ----------------------------------------------------------------------------
# Shared geometry: bilinear sample corner positions & weights per ROI
# (mirrors the `bilinear_interpolate` pre-calc; the validity mask and the
#  1/count average are folded into the weights).
# ----------------------------------------------------------------------------
def _sample_geometry(rois, height, width, pooled_h, pooled_w,
                     spatial_scale, sampling_ratio, max_grid):
    f32 = jnp.float32
    n = rois.shape[0]

    roi_start_w = rois[:, 1] * spatial_scale
    roi_start_h = rois[:, 2] * spatial_scale
    roi_end_w = rois[:, 3] * spatial_scale
    roi_end_h = rois[:, 4] * spatial_scale
    roi_w = jnp.maximum(roi_end_w - roi_start_w, 1.0)
    roi_h = jnp.maximum(roi_end_h - roi_start_h, 1.0)
    bin_h = roi_h / pooled_h
    bin_w = roi_w / pooled_w

    if sampling_ratio > 0:
        grid_h = jnp.full((n,), float(sampling_ratio), f32)
        grid_w = jnp.full((n,), float(sampling_ratio), f32)
    else:
        grid_h = jnp.ceil(roi_h / pooled_h)
        grid_w = jnp.ceil(roi_w / pooled_w)
    count = grid_h * grid_w

    ph = jnp.arange(pooled_h, dtype=f32)
    pw = jnp.arange(pooled_w, dtype=f32)
    iy = jnp.arange(max_grid, dtype=f32)
    ix = jnp.arange(max_grid, dtype=f32)

    # y: (n, PH, MG), x: (n, PW, MG)
    y = (roi_start_h[:, None, None] + ph[None, :, None] * bin_h[:, None, None]
         + (iy[None, None, :] + 0.5) * bin_h[:, None, None]
         / grid_h[:, None, None])
    x = (roi_start_w[:, None, None] + pw[None, :, None] * bin_w[:, None, None]
         + (ix[None, None, :] + 0.5) * bin_w[:, None, None]
         / grid_w[:, None, None])

    # broadcast layout (n, PH, PW, MG_y, MG_x)
    y = y[:, :, None, :, None]
    x = x[:, None, :, None, :]

    valid_y = iy[None, None, None, :, None] < grid_h[:, None, None, None, None]
    valid_x = ix[None, None, None, None, :] < grid_w[:, None, None, None, None]
    in_range = (y >= -1.0) & (y <= height) & (x >= -1.0) & (x <= width)
    mask = valid_y & valid_x & in_range

    y = jnp.maximum(y, 0.0)
    x = jnp.maximum(x, 0.0)
    y_low0 = jnp.floor(y).astype(jnp.int32)
    x_low0 = jnp.floor(x).astype(jnp.int32)
    y_hi_case = y_low0 >= height - 1
    x_hi_case = x_low0 >= width - 1
    y_low = jnp.where(y_hi_case, height - 1, y_low0)
    y_high = jnp.where(y_hi_case, height - 1, y_low0 + 1)
    x_low = jnp.where(x_hi_case, width - 1, x_low0)
    x_high = jnp.where(x_hi_case, width - 1, x_low0 + 1)
    y_eff = jnp.where(y_hi_case, y_low.astype(f32), y)
    x_eff = jnp.where(x_hi_case, x_low.astype(f32), x)

    ly = y_eff - y_low.astype(f32)
    lx = x_eff - x_low.astype(f32)
    hy = 1.0 - ly
    hx = 1.0 - lx

    # fold average (1/count) and validity mask into the weights
    scale = mask.astype(f32) / count[:, None, None, None, None]
    w1 = hy * hx * scale
    w2 = hy * lx * scale
    w3 = ly * hx * scale
    w4 = ly * lx * scale

    pos1 = y_low * width + x_low
    pos2 = y_low * width + x_high
    pos3 = y_high * width + x_low
    pos4 = y_high * width + x_high

    full = (n, pooled_h, pooled_w, max_grid, max_grid)
    pos = [jnp.broadcast_to(p_, full).astype(jnp.int32)
           for p_ in (pos1, pos2, pos3, pos4)]
    wts = [jnp.broadcast_to(w_, full).astype(f32)
           for w_ in (w1, w2, w3, w4)]
    return pos, wts


# ----------------------------------------------------------------------------
# Wrapper: block-sparse (ROI tiles x K-band) matmul via scalar prefetch.
# ----------------------------------------------------------------------------
def roi_align(bottom_data_nchw, rois, *, spatial_scale=0.0625,
              pooled_height=7, pooled_width=7, sampling_ratio=0,
              max_sampling_grid=None, max_k_span=None,
              rois_per_step=16, k_tile=4096):
    f32 = jnp.float32
    b, c, h, w = bottom_data_nchw.shape
    n = rois.shape[0]
    hw = h * w
    bhw = b * hw
    p = pooled_height * pooled_width

    rois = rois.astype(f32)
    # C-style truncation like the torch reference's int(rois[n][0]); clipped.
    batch_idx = jnp.clip(rois[:, 0].astype(jnp.int32), 0, b - 1)

    # static sampling-grid upper bound
    if sampling_ratio > 0:
        max_grid = int(sampling_ratio)
    elif max_sampling_grid is not None:
        max_grid = int(max_sampling_grid)
    else:
        # NOTE: needs concrete rois (adaptive torch semantics); pass
        # max_sampling_grid for jit-friendliness.
        roi_wf = jnp.maximum((rois[:, 3] - rois[:, 1]) * spatial_scale, 1.0)
        roi_hf = jnp.maximum((rois[:, 4] - rois[:, 2]) * spatial_scale, 1.0)
        max_grid = max(1, int(jnp.max(jnp.ceil(jnp.maximum(
            roi_hf / pooled_height, roi_wf / pooled_width)))))

    # --- ROI tiling ----------------------------------------------------------
    tr = int(rois_per_step)
    if n < 32:
        tr = 8                      # keep >=2 ROI tiles sooner (v7x megacore)
    tr = max(8, _round_up(tr, 8))   # rows = tr*49 must stay a multiple of 8
    rows = tr * p
    n_pad = _round_up(n, tr)
    n_tiles = n_pad // tr

    # --- channel / K tiling --------------------------------------------------
    c_pad = _round_up(c, 128)
    tk_cap = _round_up(max(int(k_tile), 128), 128)
    if _round_up(bhw, 128) <= tk_cap:
        # whole flattened feature map in one K block: data block index is
        # constant over the entire grid -> DMA'd once, VMEM-resident.
        tk = _round_up(bhw, 128)
        n_kblocks = 1
    else:
        k_tiles0 = _cdiv(bhw, tk_cap)
        tk = _round_up(_cdiv(bhw, k_tiles0), 128)   # balanced, minimal padding
        n_kblocks = _cdiv(bhw, tk)
    bhw_pad = n_kblocks * tk

    # --- sample columns & weights (channel independent) ----------------------
    pos, wts = _sample_geometry(rois, h, w, pooled_height, pooled_width,
                                spatial_scale, sampling_ratio, max_grid)
    base = (batch_idx[:, None, None, None, None] * hw).astype(jnp.int32)
    cols = jnp.stack([pk + base for pk in pos], axis=-1).reshape(n, p, -1)
    wvals = jnp.stack(wts, axis=-1).reshape(n, p, -1)

    # pad ROIs: replicate columns (band not widened), zero the weights.
    if n_pad > n:
        cols = jnp.concatenate(
            [cols, jnp.broadcast_to(cols[-1:], (n_pad - n,) + cols.shape[1:])],
            axis=0)
        wvals = jnp.pad(wvals, ((0, n_pad - n), (0, 0), (0, 0)))

    # --- per-ROI-tile contiguous band of K blocks -----------------------------
    if n_kblocks == 1:
        span_max = 1
        starts = jnp.zeros((n_tiles,), jnp.int32)
    else:
        blk_min = (cols.reshape(n_tiles, -1).min(axis=1) // tk).astype(jnp.int32)
        blk_max = (cols.reshape(n_tiles, -1).max(axis=1) // tk).astype(jnp.int32)
        if max_k_span is not None:
            span_max = int(max_k_span)     # must upper-bound the tile band
        else:
            # NOTE: needs concrete rois; pass max_k_span for jit-friendliness.
            span_max = int(jnp.max(blk_max - blk_min)) + 1
        span_max = min(max(span_max, 1), n_kblocks)
        starts = jnp.minimum(blk_min, n_kblocks - span_max).astype(jnp.int32)

    # --- compressed interpolation matrix (scatter-add, no one-hot) ------------
    starts_per_roi = jnp.repeat(starts, tr)                       # (n_pad,)
    lcol = cols - starts_per_roi[:, None, None] * tk              # local cols
    row_idx = (jnp.arange(n_pad, dtype=jnp.int32)[:, None, None] * p
               + jnp.arange(p, dtype=jnp.int32)[None, :, None])
    row_idx = jnp.broadcast_to(row_idx, cols.shape)
    m = jnp.zeros((n_pad * p, span_max * tk), f32)
    m = m.at[row_idx.reshape(-1), lcol.reshape(-1)].add(wvals.reshape(-1))
    m = m.astype(jnp.bfloat16)

    # --- feature map: NCHW -> (B*H*W, C), bf16, zero padded -------------------
    data = (jnp.transpose(bottom_data_nchw, (0, 2, 3, 1))
            .reshape(bhw, c).astype(jnp.bfloat16))
    data = jnp.pad(data, ((0, bhw_pad - bhw), (0, c_pad - c)))

    # --- pallas_call ----------------------------------------------------------
    m_spec = pl.BlockSpec((rows, tk), lambda i, k, s: (i, k))
    data_spec = pl.BlockSpec((tk, c_pad), lambda i, k, s: (s[i] + k, 0))
    out_spec = pl.BlockSpec((rows, c_pad), lambda i, k, s: (i, 0))

    flops = int(2 * (n_pad * p) * (span_max * tk) * c_pad)
    bytes_accessed = int(m.size * 2
                         + n_tiles * span_max * tk * c_pad * 2
                         + n_pad * p * c_pad * 4)
    vmem_need = (2 * rows * tk * 2          # M, double-buffered, bf16
                 + 2 * tk * c_pad * 2       # data, double-buffered, bf16
                 + 2 * rows * c_pad * 4)    # out, f32
    vmem_limit = int(min(max(int(vmem_need * 1.5) + (4 << 20), 16 << 20),
                         48 << 20))         # stay inside v7x's 64 MiB VMEM

    out = pl.pallas_call(
        _roi_align_kernel,
        out_shape=jax.ShapeDtypeStruct((n_pad * p, c_pad), jnp.float32),
        grid_spec=pltpu.PrefetchScalarGridSpec(
            num_scalar_prefetch=1,
            grid=(n_tiles, span_max),
            in_specs=[m_spec, data_spec],
            out_specs=out_spec,
        ),
        compiler_params=pltpu.CompilerParams(
            dimension_semantics=("parallel", "arbitrary"),
            vmem_limit_bytes=vmem_limit),
        cost_estimate=pl.CostEstimate(flops=flops, transcendentals=0,
                                      bytes_accessed=bytes_accessed),
    )(starts, m, data)

    # back to the torch output convention: (n_rois, C, pooled_h, pooled_w)
    out = out[: n * p, :c].reshape(n, pooled_height, pooled_width, c)
    return out.transpose(0, 3, 1, 2)


# ----------------------------------------------------------------------------
# Independent numpy reference mirroring the torch roiAlign loops (vectorized
# only over channels) for correctness checking.
# ----------------------------------------------------------------------------
def _roi_align_numpy_reference(data_nchw, rois, spatial_scale,
                               pooled_h, pooled_w, sampling_ratio):
    data = np.asarray(data_nchw, dtype=np.float64)
    rois = np.asarray(rois, dtype=np.float64)
    B, C, H, W = data.shape
    N = rois.shape[0]
    out = np.zeros((N, C, pooled_h, pooled_w), dtype=np.float64)
    for nidx in range(N):
        bi = int(rois[nidx, 0])
        rsw = rois[nidx, 1] * spatial_scale
        rsh = rois[nidx, 2] * spatial_scale
        rew = rois[nidx, 3] * spatial_scale
        reh = rois[nidx, 4] * spatial_scale
        rw = max(rew - rsw, 1.0)
        rh = max(reh - rsh, 1.0)
        bh = rh / pooled_h
        bw = rw / pooled_w
        gh = sampling_ratio if sampling_ratio > 0 else int(np.ceil(rh / pooled_h))
        gw = sampling_ratio if sampling_ratio > 0 else int(np.ceil(rw / pooled_w))
        count = gh * gw
        feat = data[bi].reshape(C, H * W)
        for ph in range(pooled_h):
            for pw in range(pooled_w):
                val = np.zeros((C,), dtype=np.float64)
                for iy in range(gh):
                    y0 = rsh + ph * bh + (iy + 0.5) * bh / gh
                    for ix in range(gw):
                        x0 = rsw + pw * bw + (ix + 0.5) * bw / gw
                        if y0 < -1.0 or y0 > H or x0 < -1.0 or x0 > W:
                            continue
                        y = max(y0, 0.0)
                        x = max(x0, 0.0)
                        yl = int(y)
                        xl = int(x)
                        if yl >= H - 1:
                            yh = yl = H - 1
                            y = float(yl)
                        else:
                            yh = yl + 1
                        if xl >= W - 1:
                            xh = xl = W - 1
                            x = float(xl)
                        else:
                            xh = xl + 1
                        ly = y - yl
                        lx = x - xl
                        hy = 1.0 - ly
                        hx = 1.0 - lx
                        val += (hy * hx * feat[:, yl * W + xl]
                                + hy * lx * feat[:, yl * W + xh]
                                + ly * hx * feat[:, yh * W + xl]
                                + ly * lx * feat[:, yh * W + xh])
                out[nidx, :, ph, pw] = val / count
    return out


if __name__ == "__main__":
    key = jax.random.PRNGKey(0)
    B, C, H, W = 2, 64, 16, 16
    N_ROIS = 8
    SPATIAL_SCALE = 0.0625  # feature map = image / 16
    POOL_H = POOL_W = 7

    k1, k2, k3, k4 = jax.random.split(key, 4)
    bottom_data = jax.random.normal(k1, (B, C, H, W), dtype=jnp.float32)

    # synthetic ROIs: [batch_ind, x1, y1, x2, y2] in image coordinates
    batch_ind = jax.random.randint(k2, (N_ROIS,), 0, B).astype(jnp.float32)
    x1 = jax.random.uniform(k3, (N_ROIS,), minval=0.0, maxval=150.0)
    y1 = jax.random.uniform(k4, (N_ROIS,), minval=0.0, maxval=150.0)
    bw = jax.random.uniform(jax.random.fold_in(key, 5), (N_ROIS,),
                            minval=16.0, maxval=100.0)
    bh = jax.random.uniform(jax.random.fold_in(key, 6), (N_ROIS,),
                            minval=16.0, maxval=100.0)
    rois = jnp.stack([batch_ind, x1, y1,
                      jnp.minimum(x1 + bw, 255.0),
                      jnp.minimum(y1 + bh, 255.0)], axis=1)

    out = roi_align(bottom_data, rois, spatial_scale=SPATIAL_SCALE,
                    pooled_height=POOL_H, pooled_width=POOL_W,
                    sampling_ratio=0)
    out = jax.block_until_ready(out)
    assert out.shape == (N_ROIS, C, POOL_H, POOL_W)

    ref = _roi_align_numpy_reference(bottom_data, rois, SPATIAL_SCALE,
                                     POOL_H, POOL_W, sampling_ratio=0)
    out_np = np.asarray(out, dtype=np.float64)
    max_err = float(np.max(np.abs(out_np - ref)))
    if not np.allclose(out_np, ref, atol=3e-2, rtol=3e-2):
        raise AssertionError(
            f"Pallas ROI Align does not match reference (max err {max_err})")

    print("KERNEL_OK")
</pallas_src>

<mosaic_0001>
module attributes {stable_mosaic.version = 11 : i64} {
  func.func @_roi_align_kernel(%arg0: i32, %arg1: i32, %arg2: memref<1xi32, #tpu.memory_space<smem>>, %arg3: memref<392x512xbf16, #tpu.memory_space<vmem>>, %arg4: memref<512x128xbf16, #tpu.memory_space<vmem>>, %arg5: memref<392x128xf32, #tpu.memory_space<vmem>>) attributes {dimension_semantics = [#tpu.dimension_semantics<parallel>, #tpu.dimension_semantics<arbitrary>], iteration_bounds = array<i64: 1, 1>, scalar_prefetch = 1 : i64, scratch_operands = 0 : i64, tpu.core_type = #tpu.core_type<tc>, window_params = [{transform_indices = @transform_0, window_bounds = array<i64: 392, 512>}, {transform_indices = @transform_1, window_bounds = array<i64: 512, 128>}, {transform_indices = @transform_2, window_bounds = array<i64: 392, 128>}]} {
    %c0_i32 = arith.constant 0 : i32
    %0 = arith.cmpi eq, %arg1, %c0_i32 : i32
    %1 = arith.extui %0 : i1 to i32
    %c0_i32_0 = arith.constant 0 : i32
    %2 = arith.cmpi ne, %1, %c0_i32_0 : i32
    scf.if %2 {
      %cst_8 = arith.constant 0.000000e+00 : f32
      %9 = vector.broadcast %cst_8 : f32 to vector<392x128xf32>
      %c0_9 = arith.constant 0 : index
      %c0_10 = arith.constant 0 : index
      %10 = vector.load %arg5[%c0_9, %c0_10] : memref<392x128xf32, #tpu.memory_space<vmem>>, vector<392x128xf32>
      tpu.vector_store %arg5[%c0_9, %c0_10], %9 {strides = array<i32>} : memref<392x128xf32, #tpu.memory_space<vmem>>, vector<392x128xf32>,
    } else {
    }
    %c0 = arith.constant 0 : index
    %c0_1 = arith.constant 0 : index
    %3 = vector.load %arg5[%c0, %c0_1] : memref<392x128xf32, #tpu.memory_space<vmem>>, vector<392x128xf32>
    %c0_2 = arith.constant 0 : index
    %c0_3 = arith.constant 0 : index
    %4 = vector.load %arg3[%c0_2, %c0_3] : memref<392x512xbf16, #tpu.memory_space<vmem>>, vector<392x512xbf16>
    %c0_4 = arith.constant 0 : index
    %c0_5 = arith.constant 0 : index
    %5 = vector.load %arg4[%c0_4, %c0_5] : memref<512x128xbf16, #tpu.memory_space<vmem>>, vector<512x128xbf16>
    %cst = arith.constant dense<0.000000e+00> : vector<392x128xf32>
    %6 = tpu.matmul %4, %5, %cst {dimension_numbers = #tpu.dot_dimension_numbers<[1], [0], [0], [1], [0, 0, 1, 1], [], []>} : vector<392x512xbf16>, vector<512x128xbf16>, vector<392x128xf32> -> vector<392x128xf32>
    %7 = arith.addf %3, %6 : vector<392x128xf32>
    %c0_6 = arith.constant 0 : index
    %c0_7 = arith.constant 0 : index
    %8 = vector.load %arg5[%c0_6, %c0_7] : memref<392x128xf32, #tpu.memory_space<vmem>>, vector<392x128xf32>
    tpu.vector_store %arg5[%c0_6, %c0_7], %7 {strides = array<i32>} : memref<392x128xf32, #tpu.memory_space<vmem>>, vector<392x128xf32>,
    return
  }
  func.func @transform_0(%arg0: i32, %arg1: i32, %arg2: memref<1xi32, #tpu.memory_space<smem>>) -> (i32, i32) {
    %c0_i32 = arith.constant 0 : i32
    return %arg0, %arg1 : i32, i32
  }
  func.func @transform_1(%arg0: i32, %arg1: i32, %arg2: memref<1xi32, #tpu.memory_space<smem>>) -> (i32, i32) {
    %0 = arith.index_cast %arg0 : i32 to index
    %1 = memref.load %arg2[%0] : memref<1xi32, #tpu.memory_space<smem>>
    %2 = arith.addi %1, %arg1 : i32
    %c0_i32 = arith.constant 0 : i32
    %c0_i32_0 = arith.constant 0 : i32
    return %2, %c0_i32 : i32, i32
  }
  func.func @transform_2(%arg0: i32, %arg1: i32, %arg2: memref<1xi32, #tpu.memory_space<smem>>) -> (i32, i32) {
    %c0_i32 = arith.constant 0 : i32
    %c0_i32_0 = arith.constant 0 : i32
    return %arg0, %c0_i32 : i32, i32
  }
}

</mosaic_0001>

<llo_original>
// kernel: tpu_custom_call.1
$region0: #{tpu_custom_call.1}
  #allocation0 [shape = 'u32[]', space=smem, size = 0x4, offset = 0x4, fixed_abs, tag = 'smem constant byte address 0x4 - core index']
  #allocation1 [shape = 'u32[144,128]{1,0:T(1,128)}', space=vmem, size = 0x12000, scoped, tag = 'internal scratch']
  #allocation2 [shape = 's32[1]{0}', space=sflag, size = 0x4, scoped, tag = 'scoped memory for tpu_custom_call.1']
  #allocation3 [shape = 's32[1]{0:T(128)S(6)}', space=smem, size = 0x200, scoped, tag = 'prefetched SMEM operand 0']
  %s0 = inlined_call_operand.<no memory space> [shape: s32[1], index: 0, kind: input, shape index: {}]
  %s1 = inlined_call_operand.hbm [shape: bf16[392,512], index: 1, kind: input, shape index: {}]
  %s2 = inlined_call_operand.hbm [shape: bf16[512,128], index: 2, kind: input, shape index: {}]
  %s3 = inlined_call_operand.hbm [shape: f32[392,128], index: 3, kind: output, shape index: {}]
  %s4 = sld [smem:[#allocation0]]
  $region30: #{tpu_custom_call.1} parent=0
    _
  %s6 = ssub.s32 1, %s4
  %s7 = scalar_select 0, %s6, %s4
  %8 = sst [smem:[#allocation3]] %s0
  $region1: #{tpu_custom_call.1} parent=0
    #allocation4 [shape = 'u8[401408]{0}', space=vmem, size = 0x62000, scoped, tag = 'input window, operand 1, single buffered']
    #allocation5 [shape = 's32[1]{0}', space=sflag, size = 0x4, scoped, tag = 'scoped memory for tpu_custom_call.1']
    #allocation6 [shape = 's32[1]{0}', space=sflag, size = 0x4, scoped, tag = 'scoped memory for tpu_custom_call.1']
    #allocation7 [shape = 'u8[131072]{0}', space=vmem, size = 0x20000, scoped, tag = 'input window, operand 2, single buffered']
    #allocation8 [shape = 's32[1]{0}', space=sflag, size = 0x4, scoped, tag = 'scoped memory for tpu_custom_call.1']
    #allocation9 [shape = 'u8[200704]{0}', space=vmem, size = 0x31000, scoped, tag = 'output window, operand 0, single buffered']
    %9 = vsyncpa [#allocation5], 0
    %10 = vsyncpa [#allocation8], 0
    %11 = vsyncpa [#allocation6], 0
    // Predicated region
    $region2: #{tpu_custom_call.1} parent=1 // pred_check
      _
    $region3: #{tpu_custom_call.1} parent=1 // pred_check_branch
      %13 = sbr.rel (0) target = $region5
    $region4: #{tpu_custom_call.1} parent=1 // pred_region
      %s15 = ssub.s32 12544, 12544
      %16 = vsyncadd [#allocation5], %s15
      %s17 = sshll.u32 [#allocation4], 4
      %s18 = int_to_ptr.vmem [resolvable:$true] %s17
      %23 = dma.hbm_to_vmem [thread:$0]  %s1, 12544, %s18, [#allocation5], 256, 256, 16
    $region5: #{tpu_custom_call.1} parent=1 // pred_fallthru
      _
    // Predicated region
    $region6: #{tpu_custom_call.1} parent=1 // pred_check
      _
    $region7: #{tpu_custom_call.1} parent=1 // pred_check_branch
      %25 = sbr.rel (0) target = $region9
    $region8: #{tpu_custom_call.1} parent=1 // pred_region
      %s26 = sld [smem:[#allocation3]]
      %s27 = sadd.s32 %s26, 0
      %s28 = smul.u32 64, %s27
      %s30 = ssub.s32 4096, 4096
      %31 = vsyncadd [#allocation8], %s30
      %s32 = smul.addr %s28, 64
      %s33 = scalar_lea.hbm %s2, %s32
      %s34 = sshll.u32 [#allocation7], 4
      %s35 = int_to_ptr.vmem [resolvable:$true] %s34
      %40 = dma.hbm_to_vmem [thread:$0]  %s33, 4096, %s35, [#allocation8], 64, 64, 4
    $region9: #{tpu_custom_call.1} parent=1 // pred_fallthru
      _
    // Predicated region
    $region10: #{tpu_custom_call.1} parent=1 // pred_check
      _
    $region11: #{tpu_custom_call.1} parent=1 // pred_check_branch
      %42 = sbr.rel (0) target = $region13
    $region12: #{tpu_custom_call.1} parent=1 // pred_region
      %43 = dma.done [#allocation5], 12544
    $region13: #{tpu_custom_call.1} parent=1 // pred_fallthru
      _
    // Predicated region
    $region14: #{tpu_custom_call.1} parent=1 // pred_check
      _
    $region15: #{tpu_custom_call.1} parent=1 // pred_check_branch
      %45 = sbr.rel (0) target = $region17
    $region16: #{tpu_custom_call.1} parent=1 // pred_region
      %46 = dma.done [#allocation8], 4096
    $region17: #{tpu_custom_call.1} parent=1 // pred_fallthru
      _
    %s47 = sld [smem:[#allocation3]]
    %s48 = sadd.s32 %s47, 0
    %s49 = smul.u32 64, %s48
    %p51 = scmp.eq.s32.totalorder 0, 0
    // Predicated region
    $region18: #{tpu_custom_call.1} parent=1 // pred_check
      %p52 = pneg %p51
    $region19: #{tpu_custom_call.1} parent=1 // pred_check_branch
      %54 = sbr.rel (%p52) target = $region21
    $region20: #{tpu_custom_call.1} parent=1 // pred_region
      %55 = vst [vmem:[#allocation9] sm:$0xff] 0.0
      %56 = vst [vmem:[#allocation9 + $0x8] sm:$0xff] 0.0
      %57 = vst [vmem:[#allocation9 + $0x10] sm:$0xff] 0.0
      %58 = vst [vmem:[#allocation9 + $0x18] sm:$0xff] 0.0
      %59 = vst [vmem:[#allocation9 + $0x20] sm:$0xff] 0.0
      %60 = vst [vmem:[#allocation9 + $0x28] sm:$0xff] 0.0
      %61 = vst [vmem:[#allocation9 + $0x30] sm:$0xff] 0.0
      %62 = vst [vmem:[#allocation9 + $0x38] sm:$0xff] 0.0
      %63 = vst [vmem:[#allocation9 + $0x40] sm:$0xff] 0.0
      %64 = vst [vmem:[#allocation9 + $0x48] sm:$0xff] 0.0
      %65 = vst [vmem:[#allocation9 + $0x50] sm:$0xff] 0.0
      %66 = vst [vmem:[#allocation9 + $0x58] sm:$0xff] 0.0
      %67 = vst [vmem:[#allocation9 + $0x60] sm:$0xff] 0.0
      %68 = vst [vmem:[#allocation9 + $0x68] sm:$0xff] 0.0
      %69 = vst [vmem:[#allocation9 + $0x70] sm:$0xff] 0.0
      %70 = vst [vmem:[#allocation9 + $0x78] sm:$0xff] 0.0
      %71 = vst [vmem:[#allocation9 + $0x80] sm:$0xff] 0.0
      %72 = vst [vmem:[#allocation9 + $0x88] sm:$0xff] 0.0
      %73 = vst [vmem:[#allocation9 + $0x90] sm:$0xff] 0.0
      %74 = vst [vmem:[#allocation9 + $0x98] sm:$0xff] 0.0
      %75 = vst [vmem:[#allocation9 + $0xa0] sm:$0xff] 0.0
      %76 = vst [vmem:[#allocation9 + $0xa8] sm:$0xff] 0.0
      %77 = vst [vmem:[#allocation9 + $0xb0] sm:$0xff] 0.0
      %78 = vst [vmem:[#allocation9 + $0xb8] sm:$0xff] 0.0
      %79 = vst [vmem:[#allocation9 + $0xc0] sm:$0xff] 0.0
      %80 = vst [vmem:[#allocation9 + $0xc8] sm:$0xff] 0.0
      %81 = vst [vmem:[#allocation9 + $0xd0] sm:$0xff] 0.0
      %82 = vst [vmem:[#allocation9 + $0xd8] sm:$0xff] 0.0
      %83 = vst [vmem:[#allocation9 + $0xe0] sm:$0xff] 0.0
      %84 = vst [vmem:[#allocation9 + $0xe8] sm:$0xff] 0.0
      %85 = vst [vmem:[#allocation9 + $0xf0] sm:$0xff] 0.0
      %86 = vst [vmem:[#allocation9 + $0xf8] sm:$0xff] 0.0
      %87 = vst [vmem:[#allocation9 + $0x100] sm:$0xff] 0.0
      %88 = vst [vmem:[#allocation9 + $0x108] sm:$0xff] 0.0
      %89 = vst [vmem:[#allocation9 + $0x110] sm:$0xff] 0.0
      %90 = vst [vmem:[#allocation9 + $0x118] sm:$0xff] 0.0
      %91 = vst [vmem:[#allocation9 + $0x120] sm:$0xff] 0.0
      %92 = vst [vmem:[#allocation9 + $0x128] sm:$0xff] 0.0
      %93 = vst [vmem:[#allocation9 + $0x130] sm:$0xff] 0.0
      %94 = vst [vmem:[#allocation9 + $0x138] sm:$0xff] 0.0
      %95 = vst [vmem:[#allocation9 + $0x140] sm:$0xff] 0.0
      %96 = vst [vmem:[#allocation9 + $0x148] sm:$0xff] 0.0
      %97 = vst [vmem:[#allocation9 + $0x150] sm:$0xff] 0.0
      %98 = vst [vmem:[#allocation9 + $0x158] sm:$0xff] 0.0
      %99 = vst [vmem:[#allocation9 + $0x160] sm:$0xff] 0.0
      %100 = vst [vmem:[#allocation9 + $0x168] sm:$0xff] 0.0
      %101 = vst [vmem:[#allocation9 + $0x170] sm:$0xff] 0.0
      %102 = vst [vmem:[#allocation9 + $0x178] sm:$0xff] 0.0
      %103 = vst [vmem:[#allocation9 + $0x180] sm:$0xff] 0.0
    $region21: #{tpu_custom_call.1} parent=1 // pred_fallthru
      _
    %v104 = vld [vmem:[#allocation9] sm:$0xff]
    %v105 = vld [vmem:[#allocation9 + $0x8] sm:$0xff]
    %v106 = vld [vmem:[#allocation9 + $0x10] sm:$0xff]
    %v107 = vld [vmem:[#allocation9 + $0x18] sm:$0xff]
    %v108 = vld [vmem:[#allocation9 + $0x20] sm:$0xff]
    %v109 = vld [vmem:[#allocation9 + $0x28] sm:$0xff]
    %v110 = vld [vmem:[#allocation9 + $0x30] sm:$0xff]
    %v111 = vld [vmem:[#allocation9 + $0x38] sm:$0xff]
    %v112 = vld [vmem:[#allocation9 + $0x40] sm:$0xff]
    %v113 = vld [vmem:[#allocation9 + $0x48] sm:$0xff]
    %v114 = vld [vmem:[#allocation9 + $0x50] sm:$0xff]
    %v115 = vld [vmem:[#allocation9 + $0x58] sm:$0xff]
    %v116 = vld [vmem:[#allocation9 + $0x60] sm:$0xff]
    %v117 = vld [vmem:[#allocation9 + $0x68] sm:$0xff]
    %v118 = vld [vmem:[#allocation9 + $0x70] sm:$0xff]
    %v119 = vld [vmem:[#allocation9 + $0x78] sm:$0xff]
    %v120 = vld [vmem:[#allocation9 + $0x80] sm:$0xff]
    %v121 = vld [vmem:[#allocation9 + $0x88] sm:$0xff]
    %v122 = vld [vmem:[#allocation9 + $0x90] sm:$0xff]
    %v123 = vld [vmem:[#allocation9 + $0x98] sm:$0xff]
    %v124 = vld [vmem:[#allocation9 + $0xa0] sm:$0xff]
    %v125 = vld [vmem:[#allocation9 + $0xa8] sm:$0xff]
    %v126 = vld [vmem:[#allocation9 + $0xb0] sm:$0xff]
    %v127 = vld [vmem:[#allocation9 + $0xb8] sm:$0xff]
    %v128 = vld [vmem:[#allocation9 + $0xc0] sm:$0xff]
    %v129 = vld [vmem:[#allocation9 + $0xc8] sm:$0xff]
    %v130 = vld [vmem:[#allocation9 + $0xd0] sm:$0xff]
    %v131 = vld [vmem:[#allocation9 + $0xd8] sm:$0xff]
    %v132 = vld [vmem:[#allocation9 + $0xe0] sm:$0xff]
    %v133 = vld [vmem:[#allocation9 + $0xe8] sm:$0xff]
    %v134 = vld [vmem:[#allocation9 + $0xf0] sm:$0xff]
    %v135 = vld [vmem:[#allocation9 + $0xf8] sm:$0xff]
    %v136 = vld [vmem:[#allocation9 + $0x100] sm:$0xff]
    %v137 = vld [vmem:[#allocation9 + $0x108] sm:$0xff]
    %v138 = vld [vmem:[#allocation9 + $0x110] sm:$0xff]
    %v139 = vld [vmem:[#allocation9 + $0x118] sm:$0xff]
    %v140 = vld [vmem:[#allocation9 + $0x120] sm:$0xff]
    %v141 = vld [vmem:[#allocation9 + $0x128] sm:$0xff]
    %v142 = vld [vmem:[#allocation9 + $0x130] sm:$0xff]
    %v143 = vld [vmem:[#allocation9 + $0x138] sm:$0xff]
    %v144 = vld [vmem:[#allocation9 + $0x140] sm:$0xff]
    %v145 = vld [vmem:[#allocation9 + $0x148] sm:$0xff]
    %v146 = vld [vmem:[#allocation9 + $0x150] sm:$0xff]
    %v147 = vld [vmem:[#allocation9 + $0x158] sm:$0xff]
    %v148 = vld [vmem:[#allocation9 + $0x160] sm:$0xff]
    %v149 = vld [vmem:[#allocation9 + $0x168] sm:$0xff]
    %v150 = vld [vmem:[#allocation9 + $0x170] sm:$0xff]
    %v151 = vld [vmem:[#allocation9 + $0x178] sm:$0xff]
    %v152 = vld [vmem:[#allocation9 + $0x180] sm:$0xff]
    %v153 = vld [vmem:[#allocation4] sm:$0xff]
    %v154 = vld [vmem:[#allocation4 + $0x8] sm:$0xff]
    %v155 = vld [vmem:[#allocation4 + $0x10] sm:$0xff]
    %v156 = vld [vmem:[#allocation4 + $0x18] sm:$0xff]
    %v157 = vld [vmem:[#allocation4 + $0x20] sm:$0xff]
    %v158 = vld [vmem:[#allocation4 + $0x28] sm:$0xff]
    %v159 = vld [vmem:[#allocation4 + $0x30] sm:$0xff]
    %v160 = vld [vmem:[#allocation4 + $0x38] sm:$0xff]
    %v161 = vld [vmem:[#allocation4 + $0x40] sm:$0xff]
    %v162 = vld [vmem:[#allocation4 + $0x48] sm:$0xff]
    %v163 = vld [vmem:[#allocation4 + $0x50] sm:$0xff]
    %v164 = vld [vmem:[#allocation4 + $0x58] sm:$0xff]
    %v165 = vld [vmem:[#allocation4 + $0x60] sm:$0xff]
    %v166 = vld [vmem:[#allocation4 + $0x68] sm:$0xff]
    %v167 = vld [vmem:[#allocation4 + $0x70] sm:$0xff]
    %v168 = vld [vmem:[#allocation4 + $0x78] sm:$0xff]
    %v169 = vld [vmem:[#allocation4 + $0x80] sm:$0xff]
    %v170 = vld [vmem:[#allocation4 + $0x88] sm:$0xff]
    %v171 = vld [vmem:[#allocation4 + $0x90] sm:$0xff]
    %v172 = vld [vmem:[#allocation4 + $0x98] sm:$0xff]
    %v173 = vld [vmem:[#allocation4 + $0xa0] sm:$0xff]
    %v174 = vld [vmem:[#allocation4 + $0xa8] sm:$0xff]
    %v175 = vld [vmem:[#allocation4 + $0xb0] sm:$0xff]
    %v176 = vld [vmem:[#allocation4 + $0xb8] sm:$0xff]
    %v177 = vld [vmem:[#allocation4 + $0xc0] sm:$0xff]
    %v178 = vld [vmem:[#allocation4 + $0xc8] sm:$0xff]
    %v179 = vld [vmem:[#allocation4 + $0xd0] sm:$0xff]
    %v180 = vld [vmem:[#allocation4 + $0xd8] sm:$0xff]
    %v181 = vld [vmem:[#allocation4 + $0xe0] sm:$0xff]
    %v182 = vld [vmem:[#allocation4 + $0xe8] sm:$0xff]
    %v183 = vld [vmem:[#allocation4 + $0xf0] sm:$0xff]
    %v184 = vld [vmem:[#allocation4 + $0xf8] sm:$0xff]
    %v185 = vld [vmem:[#allocation4 + $0x100] sm:$0xff]
    %v186 = vld [vmem:[#allocation4 + $0x108] sm:$0xff]
    %v187 = vld [vmem:[#allocation4 + $0x110] sm:$0xff]
    %v188 = vld [vmem:[#allocation4 + $0x118] sm:$0xff]
    %v189 = vld [vmem:[#allocation4 + $0x120] sm:$0xff]
    %v190 = vld [vmem:[#allocation4 + $0x128] sm:$0xff]
    %v191 = vld [vmem:[#allocation4 + $0x130] sm:$0xff]
    %v192 = vld [vmem:[#allocation4 + $0x138] sm:$0xff]
    %v193 = vld [vmem:[#allocation4 + $0x140] sm:$0xff]
    %v194 = vld [vmem:[#allocation4 + $0x148] sm:$0xff]
    %v195 = vld [vmem:[#allocation4 + $0x150] sm:$0xff]
    %v196 = vld [vmem:[#allocation4 + $0x158] sm:$0xff]
    %v197 = vld [vmem:[#allocation4 + $0x160] sm:$0xff]
    %v198 = vld [vmem:[#allocation4 + $0x168] sm:$0xff]
    %v199 = vld [vmem:[#allocation4 + $0x170] sm:$0xff]
    %v200 = vld [vmem:[#allocation4 + $0x178] sm:$0xff]
    %v201 = vld [vmem:[#allocation4 + $0x180] sm:$0xff]
    %v202 = vld [vmem:[#allocation4 + $0x188] sm:$0xff]
    %v203 = vld [vmem:[#allocation4 + $0x190] sm:$0xff]
    %v204 = vld [vmem:[#allocation4 + $0x198] sm:$0xff]
    %v205 = vld [vmem:[#allocation4 + $0x1a0] sm:$0xff]
    %v206 = vld [vmem:[#allocation4 + $0x1a8] sm:$0xff]
    %v207 = vld [vmem:[#allocation4 + $0x1b0] sm:$0xff]
    %v208 = vld [vmem:[#allocation4 + $0x1b8] sm:$0xff]
    %v209 = vld [vmem:[#allocation4 + $0x1c0] sm:$0xff]
    %v210 = vld [vmem:[#allocation4 + $0x1c8] sm:$0xff]
    %v211 = vld [vmem:[#allocation4 + $0x1d0] sm:$0xff]
    %v212 = vld [vmem:[#allocation4 + $0x1d8] sm:$0xff]
    %v213 = vld [vmem:[#allocation4 + $0x1e0] sm:$0xff]
    %v214 = vld [vmem:[#allocation4 + $0x1e8] sm:$0xff]
    %v215 = vld [vmem:[#allocation4 + $0x1f0] sm:$0xff]
    %v216 = vld [vmem:[#allocation4 + $0x1f8] sm:$0xff]
    %v217 = vld [vmem:[#allocation4 + $0x200] sm:$0xff]
    %v218 = vld [vmem:[#allocation4 + $0x208] sm:$0xff]
    %v219 = vld [vmem:[#allocation4 + $0x210] sm:$0xff]
    %v220 = vld [vmem:[#allocation4 + $0x218] sm:$0xff]
    %v221 = vld [vmem:[#allocation4 + $0x220] sm:$0xff]
    %v222 = vld [vmem:[#allocation4 + $0x228] sm:$0xff]
    %v223 = vld [vmem:[#allocation4 + $0x230] sm:$0xff]
    %v224 = vld [vmem:[#allocation4 + $0x238] sm:$0xff]
    %v225 = vld [vmem:[#allocation4 + $0x240] sm:$0xff]
    %v226 = vld [vmem:[#allocation4 + $0x248] sm:$0xff]
    %v227 = vld [vmem:[#allocation4 + $0x250] sm:$0xff]
    %v228 = vld [vmem:[#allocation4 + $0x258] sm:$0xff]
    %v229 = vld [vmem:[#allocation4 + $0x260] sm:$0xff]
    %v230 = vld [vmem:[#allocation4 + $0x268] sm:$0xff]
    %v231 = vld [vmem:[#allocation4 + $0x270] sm:$0xff]
    %v232 = vld [vmem:[#allocation4 + $0x278] sm:$0xff]
    %v233 = vld [vmem:[#allocation4 + $0x280] sm:$0xff]
    %v234 = vld [vmem:[#allocation4 + $0x288] sm:$0xff]
    %v235 = vld [vmem:[#allocation4 + $0x290] sm:$0xff]
    %v236 = vld [vmem:[#allocation4 + $0x298] sm:$0xff]
    %v237 = vld [vmem:[#allocation4 + $0x2a0] sm:$0xff]
    %v238 = vld [vmem:[#allocation4 + $0x2a8] sm:$0xff]
    %v239 = vld [vmem:[#allocation4 + $0x2b0] sm:$0xff]
    %v240 = vld [vmem:[#allocation4 + $0x2b8] sm:$0xff]
    %v241 = vld [vmem:[#allocation4 + $0x2c0] sm:$0xff]
    %v242 = vld [vmem:[#allocation4 + $0x2c8] sm:$0xff]
    %v243 = vld [vmem:[#allocation4 + $0x2d0] sm:$0xff]
    %v244 = vld [vmem:[#allocation4 + $0x2d8] sm:$0xff]
    %v245 = vld [vmem:[#allocation4 + $0x2e0] sm:$0xff]
    %v246 = vld [vmem:[#allocation4 + $0x2e8] sm:$0xff]
    %v247 = vld [vmem:[#allocation4 + $0x2f0] sm:$0xff]
    %v248 = vld [vmem:[#allocation4 + $0x2f8] sm:$0xff]
    %v249 = vld [vmem:[#allocation4 + $0x300] sm:$0xff]
    %v250 = vld [vmem:[#allocation4 + $0x308] sm:$0xff]
    %v251 = vld [vmem:[#allocation7] sm:$0xf]
    %v252 = vld [vmem:[#allocation7 + $0x4] sm:$0xf]
    %v253 = vld [vmem:[#allocation7 + $0x8] sm:$0xf]
    %v254 = vld [vmem:[#allocation7 + $0xc] sm:$0xf]
    %v255 = vld [vmem:[#allocation7 + $0x10] sm:$0xf]
    %v256 = vld [vmem:[#allocation7 + $0x14] sm:$0xf]
    %v257 = vld [vmem:[#allocation7 + $0x18] sm:$0xf]
    %v258 = vld [vmem:[#allocation7 + $0x1c] sm:$0xf]
    %v259 = vld [vmem:[#allocation7 + $0x20] sm:$0xf]
    %v260 = vld [vmem:[#allocation7 + $0x24] sm:$0xf]
    %v261 = vld [vmem:[#allocation7 + $0x28] sm:$0xf]
    %v262 = vld [vmem:[#allocation7 + $0x2c] sm:$0xf]
    %v263 = vld [vmem:[#allocation7 + $0x30] sm:$0xf]
    %v264 = vld [vmem:[#allocation7 + $0x34] sm:$0xf]
    %v265 = vld [vmem:[#allocation7 + $0x38] sm:$0xf]
    %v266 = vld [vmem:[#allocation7 + $0x3c] sm:$0xf]
    %v267 = vld [vmem:[#allocation7 + $0x40] sm:$0xf]
    %v268 = vld [vmem:[#allocation7 + $0x44] sm:$0xf]
    %v269 = vld [vmem:[#allocation7 + $0x48] sm:$0xf]
    %v270 = vld [vmem:[#allocation7 + $0x4c] sm:$0xf]
    %v271 = vld [vmem:[#allocation7 + $0x50] sm:$0xf]
    %v272 = vld [vmem:[#allocation7 + $0x54] sm:$0xf]
    %v273 = vld [vmem:[#allocation7 + $0x58] sm:$0xf]
    %v274 = vld [vmem:[#allocation7 + $0x5c] sm:$0xf]
    %v275 = vld [vmem:[#allocation7 + $0x60] sm:$0xf]
    %v276 = vld [vmem:[#allocation7 + $0x64] sm:$0xf]
    %v277 = vld [vmem:[#allocation7 + $0x68] sm:$0xf]
    %v278 = vld [vmem:[#allocation7 + $0x6c] sm:$0xf]
    %v279 = vld [vmem:[#allocation7 + $0x70] sm:$0xf]
    %v280 = vld [vmem:[#allocation7 + $0x74] sm:$0xf]
    %v281 = vld [vmem:[#allocation7 + $0x78] sm:$0xf]
    %v282 = vld [vmem:[#allocation7 + $0x7c] sm:$0xf]
    %v283 = vld [vmem:[#allocation7 + $0x80] sm:$0xf]
    %v284 = vld [vmem:[#allocation7 + $0x84] sm:$0xf]
    %v285 = vld [vmem:[#allocation7 + $0x88] sm:$0xf]
    %v286 = vld [vmem:[#allocation7 + $0x8c] sm:$0xf]
    %v287 = vld [vmem:[#allocation7 + $0x90] sm:$0xf]
    %v288 = vld [vmem:[#allocation7 + $0x94] sm:$0xf]
    %v289 = vld [vmem:[#allocation7 + $0x98] sm:$0xf]
    %v290 = vld [vmem:[#allocation7 + $0x9c] sm:$0xf]
    %v291 = vld [vmem:[#allocation7 + $0xa0] sm:$0xf]
    %v292 = vld [vmem:[#allocation7 + $0xa4] sm:$0xf]
    %v293 = vld [vmem:[#allocation7 + $0xa8] sm:$0xf]
    %v294 = vld [vmem:[#allocation7 + $0xac] sm:$0xf]
    %v295 = vld [vmem:[#allocation7 + $0xb0] sm:$0xf]
    %v296 = vld [vmem:[#allocation7 + $0xb4] sm:$0xf]
    %v297 = vld [vmem:[#allocation7 + $0xb8] sm:$0xf]
    %v298 = vld [vmem:[#allocation7 + $0xbc] sm:$0xf]
    %v299 = vld [vmem:[#allocation7 + $0xc0] sm:$0xf]
    %v300 = vld [vmem:[#allocation7 + $0xc4] sm:$0xf]
    %v301 = vld [vmem:[#allocation7 + $0xc8] sm:$0xf]
    %v302 = vld [vmem:[#allocation7 + $0xcc] sm:$0xf]
    %v303 = vld [vmem:[#allocation7 + $0xd0] sm:$0xf]
    %v304 = vld [vmem:[#allocation7 + $0xd4] sm:$0xf]
    %v305 = vld [vmem:[#allocation7 + $0xd8] sm:$0xf]
    %v306 = vld [vmem:[#allocation7 + $0xdc] sm:$0xf]
    %v307 = vld [vmem:[#allocation7 + $0xe0] sm:$0xf]
    %v308 = vld [vmem:[#allocation7 + $0xe4] sm:$0xf]
    %v309 = vld [vmem:[#allocation7 + $0xe8] sm:$0xf]
    %v310 = vld [vmem:[#allocation7 + $0xec] sm:$0xf]
    %v311 = vld [vmem:[#allocation7 + $0xf0] sm:$0xf]
    %v312 = vld [vmem:[#allocation7 + $0xf4] sm:$0xf]
    %v313 = vld [vmem:[#allocation7 + $0xf8] sm:$0xf]
    %v314 = vld [vmem:[#allocation7 + $0xfc] sm:$0xf]
    %v413 = vunpack.c.l.b16 %v153
    %v414 = vunpack.c.h.b16 %v153
    %v415 = vunpack.c.l.b16 %v154
    %v416 = vunpack.c.h.b16 %v154
    %v417 = vunpack.c.l.b16 %v155
    %v418 = vunpack.c.h.b16 %v155
    %v419 = vunpack.c.l.b16 %v156
    %v420 = vunpack.c.h.b16 %v156
    %v421 = vunpack.c.l.b16 %v157
    %v422 = vunpack.c.h.b16 %v157
    %v423 = vunpack.c.l.b16 %v158
    %v424 = vunpack.c.h.b16 %v158
    %v425 = vunpack.c.l.b16 %v159
    %v426 = vunpack.c.h.b16 %v159
    %v427 = vunpack.c.l.b16 %v160
    %v428 = vunpack.c.h.b16 %v160
    %v429 = vunpack.c.l.b16 %v161
    %v430 = vunpack.c.h.b16 %v161
    %v431 = vunpack.c.l.b16 %v162
    %v432 = vunpack.c.h.b16 %v162
    %v433 = vunpack.c.l.b16 %v163
    %v434 = vunpack.c.h.b16 %v163
    %v435 = vunpack.c.l.b16 %v164
    %v436 = vunpack.c.h.b16 %v164
    %v437 = vunpack.c.l.b16 %v165
    %v438 = vunpack.c.h.b16 %v165
    %v439 = vunpack.c.l.b16 %v166
    %v440 = vunpack.c.h.b16 %v166
    %v441 = vunpack.c.l.b16 %v167
    %v442 = vunpack.c.h.b16 %v167
    %v443 = vunpack.c.l.b16 %v168
    %v444 = vunpack.c.h.b16 %v168
    %v445 = vunpack.c.l.b16 %v169
    %v446 = vunpack.c.h.b16 %v169
    %v447 = vunpack.c.l.b16 %v170
    %v448 = vunpack.c.h.b16 %v170
    %v449 = vunpack.c.l.b16 %v171
    %v450 = vunpack.c.h.b16 %v171
    %v451 = vunpack.c.l.b16 %v172
    %v452 = vunpack.c.h.b16 %v172
    %v453 = vunpack.c.l.b16 %v173
    %v454 = vunpack.c.h.b16 %v173
    %v455 = vunpack.c.l.b16 %v174
    %v456 = vunpack.c.h.b16 %v174
    %v457 = vunpack.c.l.b16 %v175
    %v458 = vunpack.c.h.b16 %v175
    %v459 = vunpack.c.l.b16 %v176
    %v460 = vunpack.c.h.b16 %v176
    %v461 = vunpack.c.l.b16 %v177
    %v462 = vunpack.c.h.b16 %v177
    %v463 = vunpack.c.l.b16 %v178
    %v464 = vunpack.c.h.b16 %v178
    %v465 = vunpack.c.l.b16 %v179
    %v466 = vunpack.c.h.b16 %v179
    %v467 = vunpack.c.l.b16 %v180
    %v468 = vunpack.c.h.b16 %v180
    %v469 = vunpack.c.l.b16 %v181
    %v470 = vunpack.c.h.b16 %v181
    %v471 = vunpack.c.l.b16 %v182
    %v472 = vunpack.c.h.b16 %v182
    %v473 = vunpack.c.l.b16 %v183
    %v474 = vunpack.c.h.b16 %v183
    %v475 = vunpack.c.l.b16 %v184
    %v476 = vunpack.c.h.b16 %v184
    %v477 = vunpack.c.l.b16 %v185
    %v478 = vunpack.c.h.b16 %v185
    %v479 = vunpack.c.l.b16 %v186
    %v480 = vunpack.c.h.b16 %v186
    %v481 = vunpack.c.l.b16 %v187
    %v482 = vunpack.c.h.b16 %v187
    %v483 = vunpack.c.l.b16 %v188
    %v484 = vunpack.c.h.b16 %v188
    %v485 = vunpack.c.l.b16 %v189
    %v486 = vunpack.c.h.b16 %v189
    %v487 = vunpack.c.l.b16 %v190
    %v488 = vunpack.c.h.b16 %v190
    %v489 = vunpack.c.l.b16 %v191
    %v490 = vunpack.c.h.b16 %v191
    %v491 = vunpack.c.l.b16 %v192
    %v492 = vunpack.c.h.b16 %v192
    %v493 = vunpack.c.l.b16 %v193
    %v494 = vunpack.c.h.b16 %v193
    %v495 = vunpack.c.l.b16 %v194
    %v496 = vunpack.c.h.b16 %v194
    %v497 = vunpack.c.l.b16 %v195
    %v498 = vunpack.c.h.b16 %v195
    %v499 = vunpack.c.l.b16 %v196
    %v500 = vunpack.c.h.b16 %v196
    %v501 = vunpack.c.l.b16 %v197
    %v502 = vunpack.c.h.b16 %v197
    %v503 = vunpack.c.l.b16 %v198
    %v504 = vunpack.c.h.b16 %v198
    %v505 = vunpack.c.l.b16 %v199
    %v506 = vunpack.c.h.b16 %v199
    %v507 = vunpack.c.l.b16 %v200
    %v508 = vunpack.c.h.b16 %v200
    %v509 = vunpack.c.l.b16 %v201
    %v510 = vunpack.c.h.b16 %v201
    %v511 = vunpack.c.l.b16 %v202
    %v512 = vunpack.c.h.b16 %v202
    %v513 = vunpack.c.l.b16 %v203
    %v514 = vunpack.c.h.b16 %v203
    %v515 = vunpack.c.l.b16 %v204
    %v516 = vunpack.c.h.b16 %v204
    %v517 = vunpack.c.l.b16 %v205
    %v518 = vunpack.c.h.b16 %v205
    %v519 = vunpack.c.l.b16 %v206
    %v520 = vunpack.c.h.b16 %v206
    %v521 = vunpack.c.l.b16 %v207
    %v522 = vunpack.c.h.b16 %v207
    %v523 = vunpack.c.l.b16 %v208
    %v524 = vunpack.c.h.b16 %v208
    %v525 = vunpack.c.l.b16 %v209
    %v526 = vunpack.c.h.b16 %v209
    %v527 = vunpack.c.l.b16 %v210
    %v528 = vunpack.c.h.b16 %v210
    %v529 = vunpack.c.l.b16 %v211
    %v530 = vunpack.c.h.b16 %v211
    %v531 = vunpack.c.l.b16 %v212
    %v532 = vunpack.c.h.b16 %v212
    %v533 = vunpack.c.l.b16 %v213
    %v534 = vunpack.c.h.b16 %v213
    %v535 = vunpack.c.l.b16 %v214
    %v536 = vunpack.c.h.b16 %v214
    %v537 = vunpack.c.l.b16 %v215
    %v538 = vunpack.c.h.b16 %v215
    %v539 = vunpack.c.l.b16 %v216
    %v540 = vunpack.c.h.b16 %v216
    %v541 = vunpack.c.l.b16 %v217
    %v542 = vunpack.c.h.b16 %v217
    %v543 = vunpack.c.l.b16 %v218
    %v544 = vunpack.c.h.b16 %v218
    %v545 = vunpack.c.l.b16 %v219
    %v546 = vunpack.c.h.b16 %v219
    %v547 = vunpack.c.l.b16 %v220
    %v548 = vunpack.c.h.b16 %v220
    %v549 = vunpack.c.l.b16 %v221
    %v550 = vunpack.c.h.b16 %v221
    %v551 = vunpack.c.l.b16 %v222
    %v552 = vunpack.c.h.b16 %v222
    %v553 = vunpack.c.l.b16 %v223
    %v554 = vunpack.c.h.b16 %v223
    %v555 = vunpack.c.l.b16 %v224
    %v556 = vunpack.c.h.b16 %v224
    %v557 = vunpack.c.l.b16 %v225
    %v558 = vunpack.c.h.b16 %v225
    %v559 = vunpack.c.l.b16 %v226
    %v560 = vunpack.c.h.b16 %v226
    %v561 = vunpack.c.l.b16 %v227
    %v562 = vunpack.c.h.b16 %v227
    %v563 = vunpack.c.l.b16 %v228
    %v564 = vunpack.c.h.b16 %v228
    %v565 = vunpack.c.l.b16 %v229
    %v566 = vunpack.c.h.b16 %v229
    %v567 = vunpack.c.l.b16 %v230
    %v568 = vunpack.c.h.b16 %v230
    %v569 = vunpack.c.l.b16 %v231
    %v570 = vunpack.c.h.b16 %v231
    %v571 = vunpack.c.l.b16 %v232
    %v572 = vunpack.c.h.b16 %v232
    %v573 = vunpack.c.l.b16 %v233
    %v574 = vunpack.c.h.b16 %v233
    %v575 = vunpack.c.l.b16 %v234
    %v576 = vunpack.c.h.b16 %v234
    %v577 = vunpack.c.l.b16 %v235
    %v578 = vunpack.c.h.b16 %v235
    %v579 = vunpack.c.l.b16 %v236
    %v580 = vunpack.c.h.b16 %v236
    %v581 = vunpack.c.l.b16 %v237
    %v582 = vunpack.c.h.b16 %v237
    %v583 = vunpack.c.l.b16 %v238
    %v584 = vunpack.c.h.b16 %v238
    %v585 = vunpack.c.l.b16 %v239
    %v586 = vunpack.c.h.b16 %v239
    %v587 = vunpack.c.l.b16 %v240
    %v588 = vunpack.c.h.b16 %v240
    %v589 = vunpack.c.l.b16 %v241
    %v590 = vunpack.c.h.b16 %v241
    %v591 = vunpack.c.l.b16 %v242
    %v592 = vunpack.c.h.b16 %v242
    %v593 = vunpack.c.l.b16 %v243
    %v594 = vunpack.c.h.b16 %v243
    %v595 = vunpack.c.l.b16 %v244
    %v596 = vunpack.c.h.b16 %v244
    %v597 = vunpack.c.l.b16 %v245
    %v598 = vunpack.c.h.b16 %v245
    %v599 = vunpack.c.l.b16 %v246
    %v600 = vunpack.c.h.b16 %v246
    %v601 = vunpack.c.l.b16 %v247
    %v602 = vunpack.c.h.b16 %v247
    %v603 = vunpack.c.l.b16 %v248
    %v604 = vunpack.c.h.b16 %v248
    %v605 = vunpack.c.l.b16 %v249
    %v606 = vunpack.c.h.b16 %v249
    %v607 = vunpack.c.l.b16 %v250
    %v608 = vunpack.c.h.b16 %v250
    %v609 = vpack.c.b16 %v417, %v413
    %v610 = vpack.c.b16 %v418, %v414
    %v611 = vpack.c.b16 %v419, %v415
    %v612 = vpack.c.b16 %v420, %v416
    %v613 = vpack.c.b16 %v425, %v421
    %v614 = vpack.c.b16 %v426, %v422
    %v615 = vpack.c.b16 %v427, %v423
    %v616 = vpack.c.b16 %v428, %v424
    %v617 = vpack.c.b16 %v433, %v429
    %v618 = vpack.c.b16 %v434, %v430
    %v619 = vpack.c.b16 %v435, %v431
    %v620 = vpack.c.b16 %v436, %v432
    %v621 = vpack.c.b16 %v441, %v437
    %v622 = vpack.c.b16 %v442, %v438
    %v623 = vpack.c.b16 %v443, %v439
    %v624 = vpack.c.b16 %v444, %v440
    %v625 = vpack.c.b16 %v449, %v445
    %v626 = vpack.c.b16 %v450, %v446
    %v627 = vpack.c.b16 %v451, %v447
    %v628 = vpack.c.b16 %v452, %v448
    %v629 = vpack.c.b16 %v457, %v453
    %v630 = vpack.c.b16 %v458, %v454
    %v631 = vpack.c.b16 %v459, %v455
    %v632 = vpack.c.b16 %v460, %v456
    %v633 = vpack.c.b16 %v465, %v461
    %v634 = vpack.c.b16 %v466, %v462
    %v635 = vpack.c.b16 %v467, %v463
    %v636 = vpack.c.b16 %v468, %v464
    %v637 = vpack.c.b16 %v473, %v469
    %v638 = vpack.c.b16 %v474, %v470
    %v639 = vpack.c.b16 %v475, %v471
    %v640 = vpack.c.b16 %v476, %v472
    %v641 = vpack.c.b16 %v481, %v477
    %v642 = vpack.c.b16 %v482, %v478
    %v643 = vpack.c.b16 %v483, %v479
    %v644 = vpack.c.b16 %v484, %v480
    %v645 = vpack.c.b16 %v489, %v485
    %v646 = vpack.c.b16 %v490, %v486
    %v647 = vpack.c.b16 %v491, %v487
    %v648 = vpack.c.b16 %v492, %v488
    %v649 = vpack.c.b16 %v497, %v493
    %v650 = vpack.c.b16 %v498, %v494
    %v651 = vpack.c.b16 %v499, %v495
    %v652 = vpack.c.b16 %v500, %v496
    %v653 = vpack.c.b16 %v505, %v501
    %v654 = vpack.c.b16 %v506, %v502
    %v655 = vpack.c.b16 %v507, %v503
    %v656 = vpack.c.b16 %v508, %v504
    %v657 = vpack.c.b16 %v513, %v509
    %v658 = vpack.c.b16 %v514, %v510
    %v659 = vpack.c.b16 %v515, %v511
    %v660 = vpack.c.b16 %v516, %v512
    %v661 = vpack.c.b16 %v521, %v517
    %v662 = vpack.c.b16 %v522, %v518
    %v663 = vpack.c.b16 %v523, %v519
    %v664 = vpack.c.b16 %v524, %v520
    %v665 = vpack.c.b16 %v529, %v525
    %v666 = vpack.c.b16 %v530, %v526
    %v667 = vpack.c.b16 %v531, %v527
    %v668 = vpack.c.b16 %v532, %v528
    %v669 = vpack.c.b16 %v537, %v533
    %v670 = vpack.c.b16 %v538, %v534
    %v671 = vpack.c.b16 %v539, %v535
    %v672 = vpack.c.b16 %v540, %v536
    %v673 = vpack.c.b16 %v545, %v541
    %v674 = vpack.c.b16 %v546, %v542
    %v675 = vpack.c.b16 %v547, %v543
    %v676 = vpack.c.b16 %v548, %v544
    %v677 = vpack.c.b16 %v553, %v549
    %v678 = vpack.c.b16 %v554, %v550
    %v679 = vpack.c.b16 %v555, %v551
    %v680 = vpack.c.b16 %v556, %v552
    %v681 = vpack.c.b16 %v561, %v557
    %v682 = vpack.c.b16 %v562, %v558
    %v683 = vpack.c.b16 %v563, %v559
    %v684 = vpack.c.b16 %v564, %v560
    %v685 = vpack.c.b16 %v569, %v565
    %v686 = vpack.c.b16 %v570, %v566
    %v687 = vpack.c.b16 %v571, %v567
    %v688 = vpack.c.b16 %v572, %v568
    %v689 = vpack.c.b16 %v577, %v573
    %v690 = vpack.c.b16 %v578, %v574
    %v691 = vpack.c.b16 %v579, %v575
    %v692 = vpack.c.b16 %v580, %v576
    %v693 = vpack.c.b16 %v585, %v581
    %v694 = vpack.c.b16 %v586, %v582
    %v695 = vpack.c.b16 %v587, %v583
    %v696 = vpack.c.b16 %v588, %v584
    %v697 = vpack.c.b16 %v593, %v589
    %v698 = vpack.c.b16 %v594, %v590
    %v699 = vpack.c.b16 %v595, %v591
    %v700 = vpack.c.b16 %v596, %v592
    %v701 = vpack.c.b16 %v601, %v597
    %v702 = vpack.c.b16 %v602, %v598
    %v703 = vpack.c.b16 %v603, %v599
    %v704 = vpack.c.b16 %v604, %v600
    %v705 = vpack.c.b16 %v605, %v605
    %v706 = vpack.c.b16 %v606, %v606
    %v707 = vpack.c.b16 %v607, %v607
    %v708 = vpack.c.b16 %v608, %v608
    %v873 = vunpack.c.l.b16 %v251
    %v874 = vunpack.c.l.b16 %v252
    %v875 = vunpack.c.l.b16 %v253
    %v876 = vunpack.c.l.b16 %v254
    %v877 = vunpack.c.l.b16 %v255
    %v878 = vunpack.c.l.b16 %v256
    %v879 = vunpack.c.l.b16 %v257
    %v880 = vunpack.c.l.b16 %v258
    %v881 = vunpack.c.l.b16 %v259
    %v882 = vunpack.c.l.b16 %v260
    %v883 = vunpack.c.l.b16 %v261
    %v884 = vunpack.c.l.b16 %v262
    %v885 = vunpack.c.l.b16 %v263
    %v886 = vunpack.c.l.b16 %v264
    %v887 = vunpack.c.l.b16 %v265
    %v888 = vunpack.c.l.b16 %v266
    %v889 = vunpack.c.l.b16 %v267
    %v890 = vunpack.c.l.b16 %v268
    %v891 = vunpack.c.l.b16 %v269
    %v892 = vunpack.c.l.b16 %v270
    %v893 = vunpack.c.l.b16 %v271
    %v894 = vunpack.c.l.b16 %v272
    %v895 = vunpack.c.l.b16 %v273
    %v896 = vunpack.c.l.b16 %v274
    %v897 = vunpack.c.l.b16 %v275
    %v898 = vunpack.c.l.b16 %v276
    %v899 = vunpack.c.l.b16 %v277
    %v900 = vunpack.c.l.b16 %v278
    %v901 = vunpack.c.l.b16 %v279
    %v902 = vunpack.c.l.b16 %v280
    %v903 = vunpack.c.l.b16 %v281
    %v904 = vunpack.c.l.b16 %v282
    %v905 = vunpack.c.l.b16 %v283
    %v906 = vunpack.c.l.b16 %v284
    %v907 = vunpack.c.l.b16 %v285
    %v908 = vunpack.c.l.b16 %v286
    %v909 = vunpack.c.l.b16 %v287
    %v910 = vunpack.c.l.b16 %v288
    %v911 = vunpack.c.l.b16 %v289
    %v912 = vunpack.c.l.b16 %v290
    %v913 = vunpack.c.l.b16 %v291
    %v914 = vunpack.c.l.b16 %v292
    %v915 = vunpack.c.l.b16 %v293
    %v916 = vunpack.c.l.b16 %v294
    %v917 = vunpack.c.l.b16 %v295
    %v918 = vunpack.c.l.b16 %v296
    %v919 = vunpack.c.l.b16 %v297
    %v920 = vunpack.c.l.b16 %v298
    %v921 = vunpack.c.l.b16 %v299
    %v922 = vunpack.c.l.b16 %v300
    %v923 = vunpack.c.l.b16 %v301
    %v924 = vunpack.c.l.b16 %v302
    %v925 = vunpack.c.l.b16 %v303
    %v926 = vunpack.c.l.b16 %v304
    %v927 = vunpack.c.l.b16 %v305
    %v928 = vunpack.c.l.b16 %v306
    %v929 = vunpack.c.l.b16 %v307
    %v930 = vunpack.c.l.b16 %v308
    %v931 = vunpack.c.l.b16 %v309
    %v932 = vunpack.c.l.b16 %v310
    %v933 = vunpack.c.l.b16 %v311
    %v934 = vunpack.c.l.b16 %v312
    %v935 = vunpack.c.l.b16 %v313
    %v936 = vunpack.c.l.b16 %v314
    %v937 = vpack.c.b16 %v874, %v873
    %v938 = vpack.c.b16 %v876, %v875
    %v939 = vpack.c.b16 %v878, %v877
    %v940 = vpack.c.b16 %v880, %v879
    %v941 = vpack.c.b16 %v882, %v881
    %v942 = vpack.c.b16 %v884, %v883
    %v943 = vpack.c.b16 %v886, %v885
    %v944 = vpack.c.b16 %v888, %v887
    %v945 = vpack.c.b16 %v890, %v889
    %v946 = vpack.c.b16 %v892, %v891
    %v947 = vpack.c.b16 %v894, %v893
    %v948 = vpack.c.b16 %v896, %v895
    %v949 = vpack.c.b16 %v898, %v897
    %v950 = vpack.c.b16 %v900, %v899
    %v951 = vpack.c.b16 %v902, %v901
    %v952 = vpack.c.b16 %v904, %v903
    %v953 = vpack.c.b16 %v906, %v905
    %v954 = vpack.c.b16 %v908, %v907
    %v955 = vpack.c.b16 %v910, %v909
    %v956 = vpack.c.b16 %v912, %v911
    %v957 = vpack.c.b16 %v914, %v913
    %v958 = vpack.c.b16 %v916, %v915
    %v959 = vpack.c.b16 %v918, %v917
    %v960 = vpack.c.b16 %v920, %v919
    %v961 = vpack.c.b16 %v922, %v921
    %v962 = vpack.c.b16 %v924, %v923
    %v963 = vpack.c.b16 %v926, %v925
    %v964 = vpack.c.b16 %v928, %v927
    %v965 = vpack.c.b16 %v930, %v929
    %v966 = vpack.c.b16 %v932, %v931
    %v967 = vpack.c.b16 %v934, %v933
    %v968 = vpack.c.b16 %v936, %v935
    %1001 = vmatprep.subr.bf16.mxu0 0
    %1002 = vmatpush1.bf16.msra.mxu0 %v937
    %1003 = vmatprep.subr.bf16.mxu0 0
    %1004 = vmatpush1.bf16.msra.mxu0 %v938
    %1005 = vmatprep.subr.bf16.mxu0 0
    %1006 = vmatpush1.bf16.msra.mxu0 %v939
    %1007 = vmatprep.subr.bf16.mxu0 0
    %1008 = vmatpush1.bf16.msra.mxu0 %v940
    %1009 = vmatprep.subr.bf16.mxu0 0
    %1010 = vmatpush1.bf16.msra.mxu0 %v941
    %1011 = vmatprep.subr.bf16.mxu0 0
    %1012 = vmatpush1.bf16.msra.mxu0 %v942
    %1013 = vmatprep.subr.bf16.mxu0 0
    %1014 = vmatpush1.bf16.msra.mxu0 %v943
    %1015 = vmatprep.subr.bf16.mxu0 0
    %1016 = vmatpush1.bf16.msra.mxu0 %v944
    %1017 = vmatprep.subr.bf16.mxu0 0
    %1018 = vmatpush1.bf16.msra.mxu0 %v945
    %1019 = vmatprep.subr.bf16.mxu0 0
    %1020 = vmatpush1.bf16.msra.mxu0 %v946
    %1021 = vmatprep.subr.bf16.mxu0 0
    %1022 = vmatpush1.bf16.msra.mxu0 %v947
    %1023 = vmatprep.subr.bf16.mxu0 0
    %1024 = vmatpush1.bf16.msra.mxu0 %v948
    %1025 = vmatprep.subr.bf16.mxu0 0
    %1026 = vmatpush1.bf16.msra.mxu0 %v949
    %1027 = vmatprep.subr.bf16.mxu0 0
    %1028 = vmatpush1.bf16.msra.mxu0 %v950
    %1029 = vmatprep.subr.bf16.mxu0 0
    %1030 = vmatpush1.bf16.msra.mxu0 %v951
    %1031 = vmatprep.subr.bf16.mxu0 0
    %1032 = vmatpush1.bf16.msra.mxu0 %v952
    %1033 = vmatprep.mubr.bf16.mxu0 %v610
    %1034 = vmatmul.mubr.bf16.gmra.mrb[0].mxu0 %v609
    %v1035 = vpop.f32.mrb[0].mxu0
    %v1036 = vadd.f32 0.0, %v1035
    %v1037 = vpop.f32.mrb[0].mxu0
    %v1038 = vpop.f32.mrb[0].mxu0
    %v1039 = vadd.f32 0.0, %v1038
    %v1040 = vpop.f32.mrb[0].mxu0
    %1041 = vmatprep.mubr.bf16.mxu0 %v614
    %1042 = vmatmul.mubr.bf16.gmra.mrb[0].mxu0 %v613
    %v1043 = vpop.f32.mrb[0].mxu0
    %v1044 = vadd.f32 0.0, %v1043
    %v1045 = vpop.f32.mrb[0].mxu0
    %v1046 = vpop.f32.mrb[0].mxu0
    %v1047 = vadd.f32 0.0, %v1046
    %v1048 = vpop.f32.mrb[0].mxu0
    %1049 = vmatprep.mubr.bf16.mxu0 %v618
    %1050 = vmatmul.mubr.bf16.gmra.mrb[0].mxu0 %v617
    %v1051 = vpop.f32.mrb[0].mxu0
    %v1052 = vadd.f32 0.0, %v1051
    %v1053 = vpop.f32.mrb[0].mxu0
    %v1054 = vpop.f32.mrb[0].mxu0
    %v1055 = vadd.f32 0.0, %v1054
    %v1056 = vpop.f32.mrb[0].mxu0
    %1057 = vmatprep.mubr.bf16.mxu0 %v622
    %1058 = vmatmul.mubr.bf16.gmra.mrb[0].mxu0 %v621
    %v1059 = vpop.f32.mrb[0].mxu0
    %v1060 = vadd.f32 0.0, %v1059
    %v1061 = vpop.f32.mrb[0].mxu0
    %v1062 = vpop.f32.mrb[0].mxu0
    %v1063 = vadd.f32 0.0, %v1062
    %v1064 = vpop.f32.mrb[0].mxu0
    %1065 = vmatprep.mubr.bf16.mxu0 %v626
    %1066 = vmatmul.mubr.bf16.gmra.mrb[0].mxu0 %v625
    %v1067 = vpop.f32.mrb[0].mxu0
    %v1068 = vadd.f32 0.0, %v1067
    %v1069 = vpop.f32.mrb[0].mxu0
    %v1070 = vpop.f32.mrb[0].mxu0
    %v1071 = vadd.f32 0.0, %v1070
    %v1072 = vpop.f32.mrb[0].mxu0
    %1073 = vmatprep.mubr.bf16.mxu0 %v630
    %1074 = vmatmul.mubr.bf16.gmra.mrb[0].mxu0 %v629
    %v1075 = vpop.f32.mrb[0].mxu0
    %v1076 = vadd.f32 0.0, %v1075
    %v1077 = vpop.f32.mrb[0].mxu0
    %v1078 = vpop.f32.mrb[0].mxu0
    %v1079 = vadd.f32 0.0, %v1078
    %v1080 = vpop.f32.mrb[0].mxu0
    %1081 = vmatprep.mubr.bf16.mxu0 %v634
    %1082 = vmatmul.mubr.bf16.gmra.mrb[0].mxu0 %v633
    %v1083 = vpop.f32.mrb[0].mxu0
    %v1084 = vadd.f32 0.0, %v1083
    %v1085 = vpop.f32.mrb[0].mxu0
    %v1086 = vpop.f32.mrb[0].mxu0
    %v1087 = vadd.f32 0.0, %v1086
    %v1088 = vpop.f32.mrb[0].mxu0
    %1089 = vmatprep.mubr.bf16.mxu0 %v638
    %1090 = vmatmul.mubr.bf16.gmra.mrb[0].mxu0 %v637
    %v1091 = vpop.f32.mrb[0].mxu0
    %v1092 = vadd.f32 0.0, %v1091
    %v1093 = vpop.f32.mrb[0].mxu0
    %v1094 = vpop.f32.mrb[0].mxu0
    %v1095 = vadd.f32 0.0, %v1094
    %v1096 = vpop.f32.mrb[0].mxu0
    %1097 = vmatprep.mubr.bf16.mxu0 %v642
    %1098 = vmatmul.mubr.bf16.gmra.mrb[0].mxu0 %v641
    %v1099 = vpop.f32.mrb[0].mxu0
    %v1100 = vadd.f32 0.0, %v1099
    %v1101 = vpop.f32.mrb[0].mxu0
    %v1102 = vpop.f32.mrb[0].mxu0
    %v1103 = vadd.f32 0.0, %v1102
    %v1104 = vpop.f32.mrb[0].mxu0
    %1105 = vmatprep.mubr.bf16.mxu0 %v646
    %1106 = vmatmul.mubr.bf16.gmra.mrb[0].mxu0 %v645
    %v1107 = vpop.f32.mrb[0].mxu0
    %v1108 = vadd.f32 0.0, %v1107
    %v1109 = vpop.f32.mrb[0].mxu0
    %v1110 = vpop.f32.mrb[0].mxu0
    %v1111 = vadd.f32 0.0, %v1110
    %v1112 = vpop.f32.mrb[0].mxu0
    %1113 = vmatprep.mubr.bf16.mxu0 %v650
    %1114 = vmatmul.mubr.bf16.gmra.mrb[0].mxu0 %v649
    %v1115 = vpop.f32.mrb[0].mxu0
    %v1116 = vadd.f32 0.0, %v1115
    %v1117 = vpop.f32.mrb[0].mxu0
    %v1118 = vpop.f32.mrb[0].mxu0
    %v1119 = vadd.f32 0.0, %v1118
    %v1120 = vpop.f32.mrb[0].mxu0
    %1121 = vmatprep.mubr.bf16.mxu0 %v654
    %1122 = vmatmul.mubr.bf16.gmra.mrb[0].mxu0 %v653
    %v1123 = vpop.f32.mrb[0].mxu0
    %v1124 = vadd.f32 0.0, %v1123
    %v1125 = vpop.f32.mrb[0].mxu0
    %v1126 = vpop.f32.mrb[0].mxu0
    %v1127 = vadd.f32 0.0, %v1126
    %v1128 = vpop.f32.mrb[0].mxu0
    %1129 = vmatprep.mubr.bf16.mxu0 %v658
    %1130 = vmatmul.mubr.bf16.gmra.mrb[0].mxu0 %v657
    %v1131 = vpop.f32.mrb[0].mxu0
    %v1132 = vadd.f32 0.0, %v1131
    %v1133 = vpop.f32.mrb[0].mxu0
    %v1134 = vpop.f32.mrb[0].mxu0
    %v1135 = vadd.f32 0.0, %v1134
    %v1136 = vpop.f32.mrb[0].mxu0
    %1137 = vmatprep.mubr.bf16.mxu0 %v662
    %1138 = vmatmul.mubr.bf16.gmra.mrb[0].mxu0 %v661
    %v1139 = vpop.f32.mrb[0].mxu0
    %v1140 = vadd.f32 0.0, %v1139
    %v1141 = vpop.f32.mrb[0].mxu0
    %v1142 = vpop.f32.mrb[0].mxu0
    %v1143 = vadd.f32 0.0, %v1142
    %v1144 = vpop.f32.mrb[0].mxu0
    %1145 = vmatprep.mubr.bf16.mxu0 %v666
    %1146 = vmatmul.mubr.bf16.gmra.mrb[0].mxu0 %v665
    %v1147 = vpop.f32.mrb[0].mxu0
    %v1148 = vadd.f32 0.0, %v1147
    %v1149 = vpop.f32.mrb[0].mxu0
    %v1150 = vpop.f32.mrb[0].mxu0
    %v1151 = vadd.f32 0.0, %v1150
    %v1152 = vpop.f32.mrb[0].mxu0
    %1153 = vmatprep.mubr.bf16.mxu0 %v670
    %1154 = vmatmul.mubr.bf16.gmra.mrb[0].mxu0 %v669
    %v1155 = vpop.f32.mrb[0].mxu0
    %v1156 = vadd.f32 0.0, %v1155
    %v1157 = vpop.f32.mrb[0].mxu0
    %v1158 = vpop.f32.mrb[0].mxu0
    %v1159 = vadd.f32 0.0, %v1158
    %v1160 = vpop.f32.mrb[0].mxu0
    %1161 = vmatprep.mubr.bf16.mxu0 %v674
    %1162 = vmatmul.mubr.bf16.gmra.mrb[0].mxu0 %v673
    %v1163 = vpop.f32.mrb[0].mxu0
    %v1164 = vadd.f32 0.0, %v1163
    %v1165 = vpop.f32.mrb[0].mxu0
    %v1166 = vpop.f32.mrb[0].mxu0
    %v1167 = vadd.f32 0.0, %v1166
    %v1168 = vpop.f32.mrb[0].mxu0
    %1169 = vmatprep.mubr.bf16.mxu0 %v678
    %1170 = vmatmul.mubr.bf16.gmra.mrb[0].mxu0 %v677
    %v1171 = vpop.f32.mrb[0].mxu0
    %v1172 = vadd.f32 0.0, %v1171
    %v1173 = vpop.f32.mrb[0].mxu0
    %v1174 = vpop.f32.mrb[0].mxu0
    %v1175 = vadd.f32 0.0, %v1174
    %v1176 = vpop.f32.mrb[0].mxu0
    %1177 = vmatprep.mubr.bf16.mxu0 %v682
    %1178 = vmatmul.mubr.bf16.gmra.mrb[0].mxu0 %v681
    %v1179 = vpop.f32.mrb[0].mxu0
    %v1180 = vadd.f32 0.0, %v1179
    %v1181 = vpop.f32.mrb[0].mxu0
    %v1182 = vpop.f32.mrb[0].mxu0
    %v1183 = vadd.f32 0.0, %v1182
    %v1184 = vpop.f32.mrb[0].mxu0
    %1185 = vmatprep.mubr.bf16.mxu0 %v686
    %1186 = vmatmul.mubr.bf16.gmra.mrb[0].mxu0 %v685
    %v1187 = vpop.f32.mrb[0].mxu0
    %v1188 = vadd.f32 0.0, %v1187
    %v1189 = vpop.f32.mrb[0].mxu0
    %v1190 = vpop.f32.mrb[0].mxu0
    %v1191 = vadd.f32 0.0, %v1190
    %v1192 = vpop.f32.mrb[0].mxu0
    %1193 = vmatprep.mubr.bf16.mxu0 %v690
    %1194 = vmatmul.mubr.bf16.gmra.mrb[0].mxu0 %v689
    %v1195 = vpop.f32.mrb[0].mxu0
    %v1196 = vadd.f32 0.0, %v1195
    %v1197 = vpop.f32.mrb[0].mxu0
    %v1198 = vpop.f32.mrb[0].mxu0
    %v1199 = vadd.f32 0.0, %v1198
    %v1200 = vpop.f32.mrb[0].mxu0
    %1201 = vmatprep.mubr.bf16.mxu0 %v694
    %1202 = vmatmul.mubr.bf16.gmra.mrb[0].mxu0 %v693
    %v1203 = vpop.f32.mrb[0].mxu0
    %v1204 = vadd.f32 0.0, %v1203
    %v1205 = vpop.f32.mrb[0].mxu0
    %v1206 = vpop.f32.mrb[0].mxu0
    %v1207 = vadd.f32 0.0, %v1206
    %v1208 = vpop.f32.mrb[0].mxu0
    %1209 = vmatprep.mubr.bf16.mxu0 %v698
    %1210 = vmatmul.mubr.bf16.gmra.mrb[0].mxu0 %v697
    %v1211 = vpop.f32.mrb[0].mxu0
    %v1212 = vadd.f32 0.0, %v1211
    %v1213 = vpop.f32.mrb[0].mxu0
    %v1214 = vpop.f32.mrb[0].mxu0
    %v1215 = vadd.f32 0.0, %v1214
    %v1216 = vpop.f32.mrb[0].mxu0
    %1217 = vmatprep.mubr.bf16.mxu0 %v702
    %1218 = vmatmul.mubr.bf16.gmra.mrb[0].mxu0 %v701
    %v1219 = vpop.f32.mrb[0].mxu0
    %v1220 = vadd.f32 0.0, %v1219
    %v1221 = vpop.f32.mrb[0].mxu0
    %v1222 = vpop.f32.mrb[0].mxu0
    %v1223 = vadd.f32 0.0, %v1222
    %v1224 = vpop.f32.mrb[0].mxu0
    %1225 = vmatprep.mubr.bf16.mxu0 %v706
    %1226 = vmatmul.mubr.bf16.gmra.mrb[0].mxu0 %v705
    %v1227 = vpop.f32.mrb[0].mxu0
    %v1228 = vadd.f32 0.0, %v1227
    %v1229 = vpop.f32.mrb[0].mxu0
    %v1230 = vpop.f32.mrb[0].mxu0
    %v1231 = vpop.f32.mrb[0].mxu0
    %1232 = vdwg.mxu0
    %1233 = vmatprep.subr.bf16.mxu0 0
    %1234 = vmatpush1.bf16.msra.mxu0 %v953
    %1235 = vmatprep.subr.bf16.mxu0 0
    %1236 = vmatpush1.bf16.msra.mxu0 %v954
    %1237 = vmatprep.subr.bf16.mxu0 0
    %1238 = vmatpush1.bf16.msra.mxu0 %v955
    %1239 = vmatprep.subr.bf16.mxu0 0
    %1240 = vmatpush1.bf16.msra.mxu0 %v956
    %1241 = vmatprep.subr.bf16.mxu0 0
    %1242 = vmatpush1.bf16.msra.mxu0 %v957
    %1243 = vmatprep.subr.bf16.mxu0 0
    %1244 = vmatpush1.bf16.msra.mxu0 %v958
    %1245 = vmatprep.subr.bf16.mxu0 0
    %1246 = vmatpush1.bf16.msra.mxu0 %v959
    %1247 = vmatprep.subr.bf16.mxu0 0
    %1248 = vmatpush1.bf16.msra.mxu0 %v960
    %1249 = vmatprep.subr.bf16.mxu0 0
    %1250 = vmatpush1.bf16.msra.mxu0 %v961
    %1251 = vmatprep.subr.bf16.mxu0 0
    %1252 = vmatpush1.bf16.msra.mxu0 %v962
    %1253 = vmatprep.subr.bf16.mxu0 0
    %1254 = vmatpush1.bf16.msra.mxu0 %v963
    %1255 = vmatprep.subr.bf16.mxu0 0
    %1256 = vmatpush1.bf16.msra.mxu0 %v964
    %1257 = vmatprep.subr.bf16.mxu0 0
    %1258 = vmatpush1.bf16.msra.mxu0 %v965
    %1259 = vmatprep.subr.bf16.mxu0 0
    %1260 = vmatpush1.bf16.msra.mxu0 %v966
    %1261 = vmatprep.subr.bf16.mxu0 0
    %1262 = vmatpush1.bf16.msra.mxu0 %v967
    %1263 = vmatprep.subr.bf16.mxu0 0
    %1264 = vmatpush1.bf16.msra.mxu0 %v968
    %1265 = vmatprep.mubr.bf16.mxu0 %v612
    %1266 = vmatmul.mubr.bf16.gmra.mrb[0].mxu0 %v611
    %v1267 = vpop.f32.mrb[0].mxu0
    %v1268 = vadd.f32 %v1036, %v1267
    %v1269 = vpop.f32.mrb[0].mxu0
    %v1270 = vpop.f32.mrb[0].mxu0
    %v1271 = vadd.f32 %v1039, %v1270
    %v1272 = vpop.f32.mrb[0].mxu0
    %1273 = vmatprep.mubr.bf16.mxu0 %v616
    %1274 = vmatmul.mubr.bf16.gmra.mrb[0].mxu0 %v615
    %v1275 = vpop.f32.mrb[0].mxu0
    %v1276 = vadd.f32 %v1044, %v1275
    %v1277 = vpop.f32.mrb[0].mxu0
    %v1278 = vpop.f32.mrb[0].mxu0
    %v1279 = vadd.f32 %v1047, %v1278
    %v1280 = vpop.f32.mrb[0].mxu0
    %1281 = vmatprep.mubr.bf16.mxu0 %v620
    %1282 = vmatmul.mubr.bf16.gmra.mrb[0].mxu0 %v619
    %v1283 = vpop.f32.mrb[0].mxu0
    %v1284 = vadd.f32 %v1052, %v1283
    %v1285 = vpop.f32.mrb[0].mxu0
    %v1286 = vpop.f32.mrb[0].mxu0
    %v1287 = vadd.f32 %v1055, %v1286
    %v1288 = vpop.f32.mrb[0].mxu0
    %1289 = vmatprep.mubr.bf16.mxu0 %v624
    %1290 = vmatmul.mubr.bf16.gmra.mrb[0].mxu0 %v623
    %v1291 = vpop.f32.mrb[0].mxu0
    %v1292 = vadd.f32 %v1060, %v1291
    %v1293 = vpop.f32.mrb[0].mxu0
    %v1294 = vpop.f32.mrb[0].mxu0
    %v1295 = vadd.f32 %v1063, %v1294
    %v1296 = vpop.f32.mrb[0].mxu0
    %1297 = vmatprep.mubr.bf16.mxu0 %v628
    %1298 = vmatmul.mubr.bf16.gmra.mrb[0].mxu0 %v627
    %v1299 = vpop.f32.mrb[0].mxu0
    %v1300 = vadd.f32 %v1068, %v1299
    %v1301 = vpop.f32.mrb[0].mxu0
    %v1302 = vpop.f32.mrb[0].mxu0
    %v1303 = vadd.f32 %v1071, %v1302
    %v1304 = vpop.f32.mrb[0].mxu0
    %1305 = vmatprep.mubr.bf16.mxu0 %v632
    %1306 = vmatmul.mubr.bf16.gmra.mrb[0].mxu0 %v631
    %v1307 = vpop.f32.mrb[0].mxu0
    %v1308 = vadd.f32 %v1076, %v1307
    %v1309 = vpop.f32.mrb[0].mxu0
    %v1310 = vpop.f32.mrb[0].mxu0
    %v1311 = vadd.f32 %v1079, %v1310
    %v1312 = vpop.f32.mrb[0].mxu0
    %1313 = vmatprep.mubr.bf16.mxu0 %v636
    %1314 = vmatmul.mubr.bf16.gmra.mrb[0].mxu0 %v635
    %v1315 = vpop.f32.mrb[0].mxu0
    %v1316 = vadd.f32 %v1084, %v1315
    %v1317 = vpop.f32.mrb[0].mxu0
    %v1318 = vpop.f32.mrb[0].mxu0
    %v1319 = vadd.f32 %v1087, %v1318
    %v1320 = vpop.f32.mrb[0].mxu0
    %1321 = vmatprep.mubr.bf16.mxu0 %v640
    %1322 = vmatmul.mubr.bf16.gmra.mrb[0].mxu0 %v639
    %v1323 = vpop.f32.mrb[0].mxu0
    %v1324 = vadd.f32 %v1092, %v1323
    %v1325 = vpop.f32.mrb[0].mxu0
    %v1326 = vpop.f32.mrb[0].mxu0
    %v1327 = vadd.f32 %v1095, %v1326
    %v1328 = vpop.f32.mrb[0].mxu0
    %1329 = vmatprep.mubr.bf16.mxu0 %v644
    %1330 = vmatmul.mubr.bf16.gmra.mrb[0].mxu0 %v643
    %v1331 = vpop.f32.mrb[0].mxu0
    %v1332 = vadd.f32 %v1100, %v1331
    %v1333 = vpop.f32.mrb[0].mxu0
    %v1334 = vpop.f32.mrb[0].mxu0
    %v1335 = vadd.f32 %v1103, %v1334
    %v1336 = vpop.f32.mrb[0].mxu0
    %1337 = vmatprep.mubr.bf16.mxu0 %v648
    %1338 = vmatmul.mubr.bf16.gmra.mrb[0].mxu0 %v647
    %v1339 = vpop.f32.mrb[0].mxu0
    %v1340 = vadd.f32 %v1108, %v1339
    %v1341 = vpop.f32.mrb[0].mxu0
    %v1342 = vpop.f32.mrb[0].mxu0
    %v1343 = vadd.f32 %v1111, %v1342
    %v1344 = vpop.f32.mrb[0].mxu0
    %1345 = vmatprep.mubr.bf16.mxu0 %v652
    %1346 = vmatmul.mubr.bf16.gmra.mrb[0].mxu0 %v651
    %v1347 = vpop.f32.mrb[0].mxu0
    %v1348 = vadd.f32 %v1116, %v1347
    %v1349 = vpop.f32.mrb[0].mxu0
    %v1350 = vpop.f32.mrb[0].mxu0
    %v1351 = vadd.f32 %v1119, %v1350
    %v1352 = vpop.f32.mrb[0].mxu0
    %1353 = vmatprep.mubr.bf16.mxu0 %v656
    %1354 = vmatmul.mubr.bf16.gmra.mrb[0].mxu0 %v655
    %v1355 = vpop.f32.mrb[0].mxu0
    %v1356 = vadd.f32 %v1124, %v1355
    %v1357 = vpop.f32.mrb[0].mxu0
    %v1358 = vpop.f32.mrb[0].mxu0
    %v1359 = vadd.f32 %v1127, %v1358
    %v1360 = vpop.f32.mrb[0].mxu0
    %1361 = vmatprep.mubr.bf16.mxu0 %v660
    %1362 = vmatmul.mubr.bf16.gmra.mrb[0].mxu0 %v659
    %v1363 = vpop.f32.mrb[0].mxu0
    %v1364 = vadd.f32 %v1132, %v1363
    %v1365 = vpop.f32.mrb[0].mxu0
    %v1366 = vpop.f32.mrb[0].mxu0
    %v1367 = vadd.f32 %v1135, %v1366
    %v1368 = vpop.f32.mrb[0].mxu0
    %1369 = vmatprep.mubr.bf16.mxu0 %v664
    %1370 = vmatmul.mubr.bf16.gmra.mrb[0].mxu0 %v663
    %v1371 = vpop.f32.mrb[0].mxu0
    %v1372 = vadd.f32 %v1140, %v1371
    %v1373 = vpop.f32.mrb[0].mxu0
    %v1374 = vpop.f32.mrb[0].mxu0
    %v1375 = vadd.f32 %v1143, %v1374
    %v1376 = vpop.f32.mrb[0].mxu0
    %1377 = vmatprep.mubr.bf16.mxu0 %v668
    %1378 = vmatmul.mubr.bf16.gmra.mrb[0].mxu0 %v667
    %v1379 = vpop.f32.mrb[0].mxu0
    %v1380 = vadd.f32 %v1148, %v1379
    %v1381 = vpop.f32.mrb[0].mxu0
    %v1382 = vpop.f32.mrb[0].mxu0
    %v1383 = vadd.f32 %v1151, %v1382
    %v1384 = vpop.f32.mrb[0].mxu0
    %1385 = vmatprep.mubr.bf16.mxu0 %v672
    %1386 = vmatmul.mubr.bf16.gmra.mrb[0].mxu0 %v671
    %v1387 = vpop.f32.mrb[0].mxu0
    %v1388 = vadd.f32 %v1156, %v1387
    %v1389 = vpop.f32.mrb[0].mxu0
    %v1390 = vpop.f32.mrb[0].mxu0
    %v1391 = vadd.f32 %v1159, %v1390
    %v1392 = vpop.f32.mrb[0].mxu0
    %1393 = vmatprep.mubr.bf16.mxu0 %v676
    %1394 = vmatmul.mubr.bf16.gmra.mrb[0].mxu0 %v675
    %v1395 = vpop.f32.mrb[0].mxu0
    %v1396 = vadd.f32 %v1164, %v1395
    %v1397 = vpop.f32.mrb[0].mxu0
    %v1398 = vpop.f32.mrb[0].mxu0
    %v1399 = vadd.f32 %v1167, %v1398
    %v1400 = vpop.f32.mrb[0].mxu0
    %1401 = vmatprep.mubr.bf16.mxu0 %v680
    %1402 = vmatmul.mubr.bf16.gmra.mrb[0].mxu0 %v679
    %v1403 = vpop.f32.mrb[0].mxu0
    %v1404 = vadd.f32 %v1172, %v1403
    %v1405 = vpop.f32.mrb[0].mxu0
    %v1406 = vpop.f32.mrb[0].mxu0
    %v1407 = vadd.f32 %v1175, %v1406
    %v1408 = vpop.f32.mrb[0].mxu0
    %1409 = vmatprep.mubr.bf16.mxu0 %v684
    %1410 = vmatmul.mubr.bf16.gmra.mrb[0].mxu0 %v683
    %v1411 = vpop.f32.mrb[0].mxu0
    %v1412 = vadd.f32 %v1180, %v1411
    %v1413 = vpop.f32.mrb[0].mxu0
    %v1414 = vpop.f32.mrb[0].mxu0
    %v1415 = vadd.f32 %v1183, %v1414
    %v1416 = vpop.f32.mrb[0].mxu0
    %1417 = vmatprep.mubr.bf16.mxu0 %v688
    %1418 = vmatmul.mubr.bf16.gmra.mrb[0].mxu0 %v687
    %v1419 = vpop.f32.mrb[0].mxu0
    %v1420 = vadd.f32 %v1188, %v1419
    %v1421 = vpop.f32.mrb[0].mxu0
    %v1422 = vpop.f32.mrb[0].mxu0
    %v1423 = vadd.f32 %v1191, %v1422
    %v1424 = vpop.f32.mrb[0].mxu0
    %1425 = vmatprep.mubr.bf16.mxu0 %v692
    %1426 = vmatmul.mubr.bf16.gmra.mrb[0].mxu0 %v691
    %v1427 = vpop.f32.mrb[0].mxu0
    %v1428 = vadd.f32 %v1196, %v1427
    %v1429 = vpop.f32.mrb[0].mxu0
    %v1430 = vpop.f32.mrb[0].mxu0
    %v1431 = vadd.f32 %v1199, %v1430
    %v1432 = vpop.f32.mrb[0].mxu0
    %1433 = vmatprep.mubr.bf16.mxu0 %v696
    %1434 = vmatmul.mubr.bf16.gmra.mrb[0].mxu0 %v695
    %v1435 = vpop.f32.mrb[0].mxu0
    %v1436 = vadd.f32 %v1204, %v1435
    %v1437 = vpop.f32.mrb[0].mxu0
    %v1438 = vpop.f32.mrb[0].mxu0
    %v1439 = vadd.f32 %v1207, %v1438
    %v1440 = vpop.f32.mrb[0].mxu0
    %1441 = vmatprep.mubr.bf16.mxu0 %v700
    %1442 = vmatmul.mubr.bf16.gmra.mrb[0].mxu0 %v699
    %v1443 = vpop.f32.mrb[0].mxu0
    %v1444 = vadd.f32 %v1212, %v1443
    %v1445 = vpop.f32.mrb[0].mxu0
    %v1446 = vpop.f32.mrb[0].mxu0
    %v1447 = vadd.f32 %v1215, %v1446
    %v1448 = vpop.f32.mrb[0].mxu0
    %1449 = vmatprep.mubr.bf16.mxu0 %v704
    %1450 = vmatmul.mubr.bf16.gmra.mrb[0].mxu0 %v703
    %v1451 = vpop.f32.mrb[0].mxu0
    %v1452 = vadd.f32 %v1220, %v1451
    %v1453 = vpop.f32.mrb[0].mxu0
    %v1454 = vpop.f32.mrb[0].mxu0
    %v1455 = vadd.f32 %v1223, %v1454
    %v1456 = vpop.f32.mrb[0].mxu0
    %1457 = vmatprep.mubr.bf16.mxu0 %v708
    %1458 = vmatmul.mubr.bf16.gmra.mrb[0].mxu0 %v707
    %v1459 = vpop.f32.mrb[0].mxu0
    %v1460 = vadd.f32 %v1228, %v1459
    %v1461 = vpop.f32.mrb[0].mxu0
    %v1462 = vpop.f32.mrb[0].mxu0
    %v1463 = vpop.f32.mrb[0].mxu0
    %1464 = vdwg.mxu0
    %v1465 = vadd.f32 %v104, %v1268
    %v1466 = vadd.f32 %v105, %v1271
    %v1467 = vadd.f32 %v106, %v1276
    %v1468 = vadd.f32 %v107, %v1279
    %v1469 = vadd.f32 %v108, %v1284
    %v1470 = vadd.f32 %v109, %v1287
    %v1471 = vadd.f32 %v110, %v1292
    %v1472 = vadd.f32 %v111, %v1295
    %v1473 = vadd.f32 %v112, %v1300
    %v1474 = vadd.f32 %v113, %v1303
    %v1475 = vadd.f32 %v114, %v1308
    %v1476 = vadd.f32 %v115, %v1311
    %v1477 = vadd.f32 %v116, %v1316
    %v1478 = vadd.f32 %v117, %v1319
    %v1479 = vadd.f32 %v118, %v1324
    %v1480 = vadd.f32 %v119, %v1327
    %v1481 = vadd.f32 %v120, %v1332
    %v1482 = vadd.f32 %v121, %v1335
    %v1483 = vadd.f32 %v122, %v1340
    %v1484 = vadd.f32 %v123, %v1343
    %v1485 = vadd.f32 %v124, %v1348
    %v1486 = vadd.f32 %v125, %v1351
    %v1487 = vadd.f32 %v126, %v1356
    %v1488 = vadd.f32 %v127, %v1359
    %v1489 = vadd.f32 %v128, %v1364
    %v1490 = vadd.f32 %v129, %v1367
    %v1491 = vadd.f32 %v130, %v1372
    %v1492 = vadd.f32 %v131, %v1375
    %v1493 = vadd.f32 %v132, %v1380
    %v1494 = vadd.f32 %v133, %v1383
    %v1495 = vadd.f32 %v134, %v1388
    %v1496 = vadd.f32 %v135, %v1391
    %v1497 = vadd.f32 %v136, %v1396
    %v1498 = vadd.f32 %v137, %v1399
    %v1499 = vadd.f32 %v138, %v1404
    %v1500 = vadd.f32 %v139, %v1407
    %v1501 = vadd.f32 %v140, %v1412
    %v1502 = vadd.f32 %v141, %v1415
    %v1503 = vadd.f32 %v142, %v1420
    %v1504 = vadd.f32 %v143, %v1423
    %v1505 = vadd.f32 %v144, %v1428
    %v1506 = vadd.f32 %v145, %v1431
    %v1507 = vadd.f32 %v146, %v1436
    %v1508 = vadd.f32 %v147, %v1439
    %v1509 = vadd.f32 %v148, %v1444
    %v1510 = vadd.f32 %v149, %v1447
    %v1511 = vadd.f32 %v150, %v1452
    %v1512 = vadd.f32 %v151, %v1455
    %v1513 = vadd.f32 %v152, %v1460
    %1514 = vst [vmem:[#allocation9] sm:$0xff] %v1465
    %1515 = vst [vmem:[#allocation9 + $0x8] sm:$0xff] %v1466
    %1516 = vst [vmem:[#allocation9 + $0x10] sm:$0xff] %v1467
    %1517 = vst [vmem:[#allocation9 + $0x18] sm:$0xff] %v1468
    %1518 = vst [vmem:[#allocation9 + $0x20] sm:$0xff] %v1469
    %1519 = vst [vmem:[#allocation9 + $0x28] sm:$0xff] %v1470
    %1520 = vst [vmem:[#allocation9 + $0x30] sm:$0xff] %v1471
    %1521 = vst [vmem:[#allocation9 + $0x38] sm:$0xff] %v1472
    %1522 = vst [vmem:[#allocation9 + $0x40] sm:$0xff] %v1473
    %1523 = vst [vmem:[#allocation9 + $0x48] sm:$0xff] %v1474
    %1524 = vst [vmem:[#allocation9 + $0x50] sm:$0xff] %v1475
    %1525 = vst [vmem:[#allocation9 + $0x58] sm:$0xff] %v1476
    %1526 = vst [vmem:[#allocation9 + $0x60] sm:$0xff] %v1477
    %1527 = vst [vmem:[#allocation9 + $0x68] sm:$0xff] %v1478
    %1528 = vst [vmem:[#allocation9 + $0x70] sm:$0xff] %v1479
    %1529 = vst [vmem:[#allocation9 + $0x78] sm:$0xff] %v1480
    %1530 = vst [vmem:[#allocation9 + $0x80] sm:$0xff] %v1481
    %1531 = vst [vmem:[#allocation9 + $0x88] sm:$0xff] %v1482
    %1532 = vst [vmem:[#allocation9 + $0x90] sm:$0xff] %v1483
    %1533 = vst [vmem:[#allocation9 + $0x98] sm:$0xff] %v1484
    %1534 = vst [vmem:[#allocation9 + $0xa0] sm:$0xff] %v1485
    %1535 = vst [vmem:[#allocation9 + $0xa8] sm:$0xff] %v1486
    %1536 = vst [vmem:[#allocation9 + $0xb0] sm:$0xff] %v1487
    %1537 = vst [vmem:[#allocation9 + $0xb8] sm:$0xff] %v1488
    %1538 = vst [vmem:[#allocation9 + $0xc0] sm:$0xff] %v1489
    %1539 = vst [vmem:[#allocation9 + $0xc8] sm:$0xff] %v1490
    %1540 = vst [vmem:[#allocation9 + $0xd0] sm:$0xff] %v1491
    %1541 = vst [vmem:[#allocation9 + $0xd8] sm:$0xff] %v1492
    %1542 = vst [vmem:[#allocation9 + $0xe0] sm:$0xff] %v1493
    %1543 = vst [vmem:[#allocation9 + $0xe8] sm:$0xff] %v1494
    %1544 = vst [vmem:[#allocation9 + $0xf0] sm:$0xff] %v1495
    %1545 = vst [vmem:[#allocation9 + $0xf8] sm:$0xff] %v1496
    %1546 = vst [vmem:[#allocation9 + $0x100] sm:$0xff] %v1497
    %1547 = vst [vmem:[#allocation9 + $0x108] sm:$0xff] %v1498
    %1548 = vst [vmem:[#allocation9 + $0x110] sm:$0xff] %v1499
    %1549 = vst [vmem:[#allocation9 + $0x118] sm:$0xff] %v1500
    %1550 = vst [vmem:[#allocation9 + $0x120] sm:$0xff] %v1501
    %1551 = vst [vmem:[#allocation9 + $0x128] sm:$0xff] %v1502
    %1552 = vst [vmem:[#allocation9 + $0x130] sm:$0xff] %v1503
    %1553 = vst [vmem:[#allocation9 + $0x138] sm:$0xff] %v1504
    %1554 = vst [vmem:[#allocation9 + $0x140] sm:$0xff] %v1505
    %1555 = vst [vmem:[#allocation9 + $0x148] sm:$0xff] %v1506
    %1556 = vst [vmem:[#allocation9 + $0x150] sm:$0xff] %v1507
    %1557 = vst [vmem:[#allocation9 + $0x158] sm:$0xff] %v1508
    %1558 = vst [vmem:[#allocation9 + $0x160] sm:$0xff] %v1509
    %1559 = vst [vmem:[#allocation9 + $0x168] sm:$0xff] %v1510
    %1560 = vst [vmem:[#allocation9 + $0x170] sm:$0xff] %v1511
    %1561 = vst [vmem:[#allocation9 + $0x178] sm:$0xff] %v1512
    %1562 = vst [vmem:[#allocation9 + $0x180] sm:$0xff] %v1513
    // Predicated region
    $region22: #{tpu_custom_call.1} parent=1 // pred_check
      _
    $region23: #{tpu_custom_call.1} parent=1 // pred_check_branch
      %1564 = sbr.rel (0) target = $region25
    $region24: #{tpu_custom_call.1} parent=1 // pred_region
      %s1566 = ssub.s32 6272, 6272
      %1567 = vsyncadd [#allocation6], %s1566
      %s1568 = sshll.u32 [#allocation9], 4
      %s1569 = int_to_ptr.vmem [resolvable:$true] %s1568
      %1574 = dma.vmem_to_hbm [thread:$0]  %s1569, 6272, %s3, [#allocation6], 128, 128, 8
    $region25: #{tpu_custom_call.1} parent=1 // pred_fallthru
      _
    // Predicated region
    $region26: #{tpu_custom_call.1} parent=1 // pred_check
      _
    $region27: #{tpu_custom_call.1} parent=1 // pred_check_branch
      %1576 = sbr.rel (0) target = $region29
    $region28: #{tpu_custom_call.1} parent=1 // pred_region
      %1577 = dma.done [#allocation6], 6272
    $region29: #{tpu_custom_call.1} parent=1 // pred_fallthru
      _
    %1578 = vsyncpa [#allocation5], 1
    %1579 = vsyncpa [#allocation8], 1
    %1580 = vsyncpa [#allocation6], 1

</llo_original>
